<compile_context>
chip_gen: v7x
topology: tpu7x:2x2x1
jax: 0.10.0
libtpu: 0.0.40
codegen_flags: <defaults>
</compile_context>

<pallas_src>
import functools

import jax
import jax.numpy as jnp
from jax import lax
from jax.experimental import pallas as pl
from jax.experimental.pallas import tpu as pltpu


# -------------------------- model hyper-parameters --------------------------
BATCH = 2
SEQ = 8
INPUT_SIZE = 48
HIDDEN_DIM = 32
N_LAYERS = 2            # kernel below is specialized to the module default (2)
OUTPUT_SIZE = 24
ROWS = 8                # batch rows per timestep, padded to the sublane quantum


# ------------------------------ Pallas kernel --------------------------------
def _wavefront_lstm_kernel(x_ref, h0_ref, c0_ref,
                           wx_ref, wbig_ref, bslab_ref,
                           wfc_ref, bfc_ref,
                           out_ref, hn_ref, cn_ref,
                           xp_ref,
                           *, seq_len, batch, hidden, rows):
    """Fused 2-layer LSTM (wavefront) + Linear head, single invocation.

    Gate-column layout (width 16H, built in prepare_params):
        chunk 0 [0,4H)    : f-gate,   layer-0 at lanes [0,H), layer-1 at [H,2H)
        chunk 1 [4H,8H)   : i-gate        (same intra-chunk layout)
        chunk 2 [8H,12H)  : g-gate, pre-scaled x2 (tanh(z) = 2*sigmoid(2z)-1)
        chunk 3 [12H,16H) : o-gate
    Carried state h/c: (rows, 4H) with layer-0 at lanes [0,H), layer-1 at
    [H,2H), exact zeros elsewhere (those lanes only ever hit zero weight rows).

    x_ref:    ((T+1)*rows, I)  time-major input, 8 rows/step, extra zero step
    h0_ref:   (B, 2H)          initial hidden, [h_l0 | h_l1] along lanes
    c0_ref:   (B, 2H)          initial cell
    wx_ref:   (I, 16H)         layer-0 input weights, gate-scattered
    wbig_ref: (4H, 16H)        [W_hh0 | W_ih1 ; W_hh1] block rows, rest zero
    bslab_ref:(1, 16H)         fused biases of both layers, gate-scattered
    wfc_ref:  (4H, O)          FC weights on layer-1 hidden rows, rest zero
    bfc_ref:  (1, O)
    out_ref:  (B, O)           fc(last-step hidden of top layer)
    hn_ref:   (B, 2H)          final hidden  [h_l0 | h_l1]
    cn_ref:   (B, 2H)          final cell
    xp_ref:   ((T+1)*rows, 16H) VMEM scratch: hoisted input projection slabs
    """
    T, B, H, R = seq_len, batch, hidden, rows
    G4 = 4 * H

    # ---- hoisted input projection (one MXU matmul over all padded steps) ----
    xp_ref[...] = (jnp.dot(x_ref[...], wx_ref[...],
                           preferred_element_type=jnp.float32)
                   + bslab_ref[...])

    # ---- initial carried state, built in-kernel (no wrapper pads) ----
    lane_pad = jnp.zeros((B, G4 - 2 * H), jnp.float32)
    h = jnp.concatenate([h0_ref[...], lane_pad], axis=1)          # (B, 4H)
    c = jnp.concatenate([c0_ref[...], lane_pad], axis=1)
    if R > B:
        row_pad = jnp.zeros((R - B, G4), jnp.float32)
        h = jnp.concatenate([h, row_pad], axis=0)                 # (R, 4H)
        c = jnp.concatenate([c, row_pad], axis=0)

    lane = lax.broadcasted_iota(jnp.int32, (R, G4), 1)
    is_l0 = lane < H          # layer-0 lanes (boundary-wave select mask)

    # ---- wavefront recurrence: T+1 waves, both layers per wave ----
    for s in range(T + 1):
        slab = xp_ref[s * R:(s + 1) * R, :]                       # (R, 16H)
        gates = jnp.dot(h, wbig_ref[...],
                        preferred_element_type=jnp.float32) + slab
        sig = jax.nn.sigmoid(gates)                               # one EUP pass
        f_a = sig[:, 0 * G4:1 * G4]                               # vreg-aligned
        i_a = sig[:, 1 * G4:2 * G4]
        g_a = 2.0 * sig[:, 2 * G4:3 * G4] - 1.0                   # tanh via sig
        o_a = sig[:, 3 * G4:4 * G4]
        c_new = f_a * c + i_a * g_a
        h_new = o_a * jnp.tanh(c_new)                             # 2nd EUP pass
        if s == 0:
            # layer-1 has no valid input yet: keep its (and junk) lanes.
            h = jnp.where(is_l0, h_new, h)
            c = jnp.where(is_l0, c_new, c)
        elif s == T:
            # layer-0 already finished at wave T-1: keep its lanes.
            h = jnp.where(is_l0, h, h_new)
            c = jnp.where(is_l0, c, c_new)
        else:
            h, c = h_new, c_new

    # ---- FC head on the last-timestep hidden of the top layer only ----
    out_all = jnp.dot(h, wfc_ref[...],
                      preferred_element_type=jnp.float32) + bfc_ref[...]
    out_ref[...] = out_all[0:B, :]

    # ---- final states, written densely as (B, 2H) = [h_l0 | h_l1] ----
    hn_ref[...] = h[0:B, 0:2 * H]
    cn_ref[...] = c[0:B, 0:2 * H]


# ----------------------- one-time parameter preprocessing --------------------
def prepare_params(params, *, hidden_dim=HIDDEN_DIM):
    """Hoist transposes, bias fusion, gate scattering and zero-padding out of
    the hot path.  PyTorch gate order along 4H is i|f|g|o."""
    H = hidden_dim
    G4, G16 = 4 * H, 16 * H

    def scatter(mat_t, layer):
        # mat_t: (in_dim, 4H) columns i|f|g|o -> (in_dim, 16H) chunk layout
        i_w = mat_t[:, 0:H]
        f_w = mat_t[:, H:2 * H]
        g_w = 2.0 * mat_t[:, 2 * H:3 * H]        # tanh(z) = 2*sigmoid(2z) - 1
        o_w = mat_t[:, 3 * H:4 * H]
        out = jnp.zeros((mat_t.shape[0], G16), jnp.float32)
        off = layer * H
        out = out.at[:, 0 * G4 + off:0 * G4 + off + H].set(f_w)
        out = out.at[:, 1 * G4 + off:1 * G4 + off + H].set(i_w)
        out = out.at[:, 2 * G4 + off:2 * G4 + off + H].set(g_w)
        out = out.at[:, 3 * G4 + off:3 * G4 + off + H].set(o_w)
        return out

    w_ih0_t = jnp.transpose(params["w_ih_l0"])          # (I, 4H)
    w_hh0_t = jnp.transpose(params["w_hh_l0"])          # (H, 4H)
    w_ih1_t = jnp.transpose(params["w_ih_l1"])          # (H, 4H)
    w_hh1_t = jnp.transpose(params["w_hh_l1"])          # (H, 4H)
    b0 = (params["b_ih_l0"] + params["b_hh_l0"])[None, :]
    b1 = (params["b_ih_l1"] + params["b_hh_l1"])[None, :]

    w_x = scatter(w_ih0_t, 0)                                       # (I, 16H)

    w_big = jnp.zeros((G4, G16), jnp.float32)                       # (4H, 16H)
    w_big = w_big.at[0:H, :].set(scatter(w_hh0_t, 0) + scatter(w_ih1_t, 1))
    w_big = w_big.at[H:2 * H, :].set(scatter(w_hh1_t, 1))
    # rows [2H, 4H) stay zero -> junk lanes of the carried state never leak

    b_slab = scatter(b0, 0) + scatter(b1, 1)                        # (1, 16H)

    w_fc = jnp.zeros((G4, params["w_fc"].shape[0]), jnp.float32)    # (4H, O)
    w_fc = w_fc.at[H:2 * H, :].set(jnp.transpose(params["w_fc"]))   # layer-1 h
    b_fc = params["b_fc"][None, :]

    return {"w_x": w_x, "w_big": w_big, "b_slab": b_slab,
            "w_fc": w_fc, "b_fc": b_fc}


# --------------------------------- forward -----------------------------------
@jax.jit
def vanilla_lstm_forward(prep, x, hidden):
    """Mirrors VanillaLSTM.forward (eval mode).

    x:      (B, T, input_size)
    hidden: tuple (h, c), each (B, n_layers, hidden_dim)
    returns (out (B, output_size), (h, c) each (B, n_layers, hidden_dim))
    """
    B, T, I = x.shape
    H = HIDDEN_DIM
    L = N_LAYERS
    O = prep["w_fc"].shape[1]
    R = ((B + 7) // 8) * 8          # 8-row (sublane) quantum per timestep

    h0, c0 = hidden
    h0_flat = h0.reshape(B, L * H)  # contiguous -> free reshape
    c0_flat = c0.reshape(B, L * H)

    # time-major, 8 rows per step, plus one extra zero step for the last wave
    x_tm = jnp.swapaxes(x, 0, 1)                                   # (T, B, I)
    x_pad = jnp.pad(x_tm, ((0, 1), (0, R - B), (0, 0)))            # (T+1, R, I)
    x_flat = x_pad.reshape((T + 1) * R, I)

    kernel = functools.partial(_wavefront_lstm_kernel,
                               seq_len=T, batch=B, hidden=H, rows=R)

    out, hn_flat, cn_flat = pl.pallas_call(
        kernel,
        out_shape=(jax.ShapeDtypeStruct((B, O), jnp.float32),
                   jax.ShapeDtypeStruct((B, L * H), jnp.float32),
                   jax.ShapeDtypeStruct((B, L * H), jnp.float32)),
        scratch_shapes=[pltpu.VMEM(((T + 1) * R, 16 * H), jnp.float32)],
    )(x_flat, h0_flat, c0_flat,
      prep["w_x"], prep["w_big"], prep["b_slab"],
      prep["w_fc"], prep["b_fc"])

    return out, (hn_flat.reshape(B, L, H), cn_flat.reshape(B, L, H))


# --------------------------- pure-JAX reference ------------------------------
def _ref_forward(params, x, hidden, n_layers=N_LAYERS, H=HIDDEN_DIM):
    hp = jax.lax.Precision.HIGHEST
    h0, c0 = hidden
    h0 = jnp.transpose(h0, (1, 0, 2))
    c0 = jnp.transpose(c0, (1, 0, 2))
    seq = jnp.transpose(x, (1, 0, 2))          # (T, B, I)
    hs, cs = [], []
    for l in range(n_layers):
        w_ih, w_hh = params[f"w_ih_l{l}"], params[f"w_hh_l{l}"]
        b_ih, b_hh = params[f"b_ih_l{l}"], params[f"b_hh_l{l}"]

        def step(carry, x_t):
            h, c = carry
            g = (jnp.dot(x_t, w_ih.T, precision=hp) + b_ih
                 + jnp.dot(h, w_hh.T, precision=hp) + b_hh)
            i = jax.nn.sigmoid(g[:, :H])
            f = jax.nn.sigmoid(g[:, H:2 * H])
            gg = jnp.tanh(g[:, 2 * H:3 * H])
            o = jax.nn.sigmoid(g[:, 3 * H:])
            c = f * c + i * gg
            h = o * jnp.tanh(c)
            return (h, c), h

        (hT, cT), seq = lax.scan(step, (h0[l], c0[l]), seq)
        hs.append(hT)
        cs.append(cT)
    lstm_out = jnp.transpose(seq, (1, 0, 2))
    out = jnp.dot(lstm_out[:, -1], params["w_fc"].T, precision=hp) + params["b_fc"]
    hN = jnp.transpose(jnp.stack(hs, 0), (1, 0, 2))
    cN = jnp.transpose(jnp.stack(cs, 0), (1, 0, 2))
    return out, (hN, cN)


# --------------------------------- main --------------------------------------
def _init_params(key):
    k = 1.0 / jnp.sqrt(HIDDEN_DIM)
    params = {}
    for l in range(N_LAYERS):
        in_dim = INPUT_SIZE if l == 0 else HIDDEN_DIM
        key, *sub = jax.random.split(key, 5)
        params[f"w_ih_l{l}"] = jax.random.uniform(sub[0], (4 * HIDDEN_DIM, in_dim),
                                                  jnp.float32, -k, k)
        params[f"w_hh_l{l}"] = jax.random.uniform(sub[1], (4 * HIDDEN_DIM, HIDDEN_DIM),
                                                  jnp.float32, -k, k)
        params[f"b_ih_l{l}"] = jax.random.uniform(sub[2], (4 * HIDDEN_DIM,),
                                                  jnp.float32, -k, k)
        params[f"b_hh_l{l}"] = jax.random.uniform(sub[3], (4 * HIDDEN_DIM,),
                                                  jnp.float32, -k, k)
    key, k1, k2 = jax.random.split(key, 3)
    kf = 1.0 / jnp.sqrt(HIDDEN_DIM)
    params["w_fc"] = jax.random.uniform(k1, (OUTPUT_SIZE, HIDDEN_DIM),
                                        jnp.float32, -kf, kf)
    params["b_fc"] = jax.random.uniform(k2, (OUTPUT_SIZE,), jnp.float32, -kf, kf)
    return params


if __name__ == "__main__":
    key = jax.random.PRNGKey(0)
    key, kp, kx, kh, kc = jax.random.split(key, 5)
    params = _init_params(kp)
    prep = prepare_params(params)               # one-time, outside jit

    x = jax.random.normal(kx, (BATCH, SEQ, INPUT_SIZE), jnp.float32)
    # init_hidden in the module is zeros; use small random states here to
    # exercise the full recurrence + state plumbing.
    hidden = (0.1 * jax.random.normal(kh, (BATCH, N_LAYERS, HIDDEN_DIM), jnp.float32),
              0.1 * jax.random.normal(kc, (BATCH, N_LAYERS, HIDDEN_DIM), jnp.float32))

    out, (hN, cN) = vanilla_lstm_forward(prep, x, hidden)
    jax.block_until_ready((out, hN, cN))

    ref_out, (ref_h, ref_c) = _ref_forward(params, x, hidden)
    assert out.shape == (BATCH, OUTPUT_SIZE)
    assert hN.shape == (BATCH, N_LAYERS, HIDDEN_DIM)
    assert cN.shape == (BATCH, N_LAYERS, HIDDEN_DIM)
    assert jnp.allclose(out, ref_out, rtol=1e-4, atol=1e-4)
    assert jnp.allclose(hN, ref_h, rtol=1e-4, atol=1e-4)
    assert jnp.allclose(cN, ref_c, rtol=1e-4, atol=1e-4)

    print("KERNEL_OK")
</pallas_src>

<mosaic_0001>
module attributes {stable_mosaic.version = 11 : i64} {
  func.func @_wavefront_lstm_kernel(%arg0: memref<72x48xf32, #tpu.memory_space<vmem>>, %arg1: memref<2x64xf32, #tpu.memory_space<vmem>>, %arg2: memref<2x64xf32, #tpu.memory_space<vmem>>, %arg3: memref<48x512xf32, #tpu.memory_space<vmem>>, %arg4: memref<128x512xf32, #tpu.memory_space<vmem>>, %arg5: memref<1x512xf32, #tpu.memory_space<vmem>>, %arg6: memref<128x24xf32, #tpu.memory_space<vmem>>, %arg7: memref<1x24xf32, #tpu.memory_space<vmem>>, %arg8: memref<2x24xf32, #tpu.memory_space<vmem>>, %arg9: memref<2x64xf32, #tpu.memory_space<vmem>>, %arg10: memref<2x64xf32, #tpu.memory_space<vmem>>, %arg11: memref<72x512xf32, #tpu.memory_space<vmem>>) attributes {dimension_semantics = [], scalar_prefetch = 0 : i64, scratch_operands = 1 : i64, tpu.core_type = #tpu.core_type<tc>} {
    %c0 = arith.constant 0 : index
    %c0_0 = arith.constant 0 : index
    %0 = vector.load %arg0[%c0, %c0_0] : memref<72x48xf32, #tpu.memory_space<vmem>>, vector<72x48xf32>
    %c0_1 = arith.constant 0 : index
    %c0_2 = arith.constant 0 : index
    %1 = vector.load %arg3[%c0_1, %c0_2] : memref<48x512xf32, #tpu.memory_space<vmem>>, vector<48x512xf32>
    %cst = arith.constant dense<0.000000e+00> : vector<72x512xf32>
    %2 = tpu.matmul %0, %1, %cst {dimension_numbers = #tpu.dot_dimension_numbers<[1], [0], [0], [1], [0, 0, 1, 1], [], []>} : vector<72x48xf32>, vector<48x512xf32>, vector<72x512xf32> -> vector<72x512xf32>
    %c0_3 = arith.constant 0 : index
    %c0_4 = arith.constant 0 : index
    %3 = vector.load %arg5[%c0_3, %c0_4] : memref<1x512xf32, #tpu.memory_space<vmem>>, vector<1x512xf32>
    %4 = vector.broadcast %3 : vector<1x512xf32> to vector<72x512xf32>
    %5 = arith.addf %2, %4 : vector<72x512xf32>
    %c0_5 = arith.constant 0 : index
    %c0_6 = arith.constant 0 : index
    %6 = vector.load %arg11[%c0_5, %c0_6] : memref<72x512xf32, #tpu.memory_space<vmem>>, vector<72x512xf32>
    tpu.vector_store %arg11[%c0_5, %c0_6], %5 {strides = array<i32>} : memref<72x512xf32, #tpu.memory_space<vmem>>, vector<72x512xf32>,
    %cst_7 = arith.constant 0.000000e+00 : f32
    %7 = vector.broadcast %cst_7 : f32 to vector<2x64xf32>
    %c0_8 = arith.constant 0 : index
    %c0_9 = arith.constant 0 : index
    %8 = vector.load %arg1[%c0_8, %c0_9] : memref<2x64xf32, #tpu.memory_space<vmem>>, vector<2x64xf32>
    %9 = tpu.concatenate %8, %7 in 1 : vector<2x64xf32>, vector<2x64xf32> -> vector<2x128xf32>
    %c0_10 = arith.constant 0 : index
    %c0_11 = arith.constant 0 : index
    %10 = vector.load %arg2[%c0_10, %c0_11] : memref<2x64xf32, #tpu.memory_space<vmem>>, vector<2x64xf32>
    %11 = tpu.concatenate %10, %7 in 1 : vector<2x64xf32>, vector<2x64xf32> -> vector<2x128xf32>
    %cst_12 = arith.constant 0.000000e+00 : f32
    %12 = vector.broadcast %cst_12 : f32 to vector<6x128xf32>
    %13 = tpu.concatenate %9, %12 in 0 : vector<2x128xf32>, vector<6x128xf32> -> vector<8x128xf32>
    %14 = tpu.concatenate %11, %12 in 0 : vector<2x128xf32>, vector<6x128xf32> -> vector<8x128xf32>
    %15 = tpu.iota {dimensions = array<i32: 1>} : vector<8x128xi32>
    %c32_i32 = arith.constant 32 : i32
    %16 = vector.broadcast %c32_i32 : i32 to vector<8x128xi32>
    %17 = arith.cmpi slt, %15, %16 : vector<8x128xi32>
    %c0_13 = arith.constant 0 : index
    %c0_14 = arith.constant 0 : index
    %18 = vector.load %arg11[%c0_13, %c0_14] : memref<72x512xf32, #tpu.memory_space<vmem>>, vector<8x512xf32>
    %c0_15 = arith.constant 0 : index
    %c0_16 = arith.constant 0 : index
    %19 = vector.load %arg4[%c0_15, %c0_16] : memref<128x512xf32, #tpu.memory_space<vmem>>, vector<128x512xf32>
    %cst_17 = arith.constant dense<0.000000e+00> : vector<8x512xf32>
    %20 = tpu.matmul %13, %19, %cst_17 {dimension_numbers = #tpu.dot_dimension_numbers<[1], [0], [0], [1], [0, 0, 1, 1], [], []>} : vector<8x128xf32>, vector<128x512xf32>, vector<8x512xf32> -> vector<8x512xf32>
    %21 = arith.addf %20, %18 : vector<8x512xf32>
    %22 = arith.negf %21 : vector<8x512xf32>
    %23 = math.exp %22 : vector<8x512xf32>
    %cst_18 = arith.constant 1.000000e+00 : f32
    %24 = vector.broadcast %cst_18 : f32 to vector<8x512xf32>
    %25 = arith.addf %24, %23 : vector<8x512xf32>
    %26 = arith.divf %24, %25 : vector<8x512xf32>
    %27 = vector.extract_strided_slice %26 {offsets = [0, 0], sizes = [8, 128], strides = [1, 1]} : vector<8x512xf32> to vector<8x128xf32>
    %28 = vector.extract_strided_slice %26 {offsets = [0, 128], sizes = [8, 128], strides = [1, 1]} : vector<8x512xf32> to vector<8x128xf32>
    %29 = vector.extract_strided_slice %26 {offsets = [0, 256], sizes = [8, 128], strides = [1, 1]} : vector<8x512xf32> to vector<8x128xf32>
    %cst_19 = arith.constant 2.000000e+00 : f32
    %30 = vector.broadcast %cst_19 : f32 to vector<8x128xf32>
    %31 = arith.mulf %30, %29 : vector<8x128xf32>
    %cst_20 = arith.constant 1.000000e+00 : f32
    %32 = vector.broadcast %cst_20 : f32 to vector<8x128xf32>
    %33 = arith.subf %31, %32 : vector<8x128xf32>
    %34 = vector.extract_strided_slice %26 {offsets = [0, 384], sizes = [8, 128], strides = [1, 1]} : vector<8x512xf32> to vector<8x128xf32>
    %35 = arith.mulf %27, %14 : vector<8x128xf32>
    %36 = arith.mulf %28, %33 : vector<8x128xf32>
    %37 = arith.addf %35, %36 : vector<8x128xf32>
    %38 = math.tanh %37 : vector<8x128xf32>
    %39 = arith.mulf %34, %38 : vector<8x128xf32>
    %40 = arith.select %17, %39, %13 : vector<8x128xi1>, vector<8x128xf32>
    %41 = arith.select %17, %37, %14 : vector<8x128xi1>, vector<8x128xf32>
    %c8 = arith.constant 8 : index
    %c0_21 = arith.constant 0 : index
    %42 = vector.load %arg11[%c8, %c0_21] : memref<72x512xf32, #tpu.memory_space<vmem>>, vector<8x512xf32>
    %c0_22 = arith.constant 0 : index
    %c0_23 = arith.constant 0 : index
    %43 = vector.load %arg4[%c0_22, %c0_23] : memref<128x512xf32, #tpu.memory_space<vmem>>, vector<128x512xf32>
    %cst_24 = arith.constant dense<0.000000e+00> : vector<8x512xf32>
    %44 = tpu.matmul %40, %43, %cst_24 {dimension_numbers = #tpu.dot_dimension_numbers<[1], [0], [0], [1], [0, 0, 1, 1], [], []>} : vector<8x128xf32>, vector<128x512xf32>, vector<8x512xf32> -> vector<8x512xf32>
    %45 = arith.addf %44, %42 : vector<8x512xf32>
    %46 = arith.negf %45 : vector<8x512xf32>
    %47 = math.exp %46 : vector<8x512xf32>
    %cst_25 = arith.constant 1.000000e+00 : f32
    %48 = vector.broadcast %cst_25 : f32 to vector<8x512xf32>
    %49 = arith.addf %48, %47 : vector<8x512xf32>
    %50 = arith.divf %48, %49 : vector<8x512xf32>
    %51 = vector.extract_strided_slice %50 {offsets = [0, 0], sizes = [8, 128], strides = [1, 1]} : vector<8x512xf32> to vector<8x128xf32>
    %52 = vector.extract_strided_slice %50 {offsets = [0, 128], sizes = [8, 128], strides = [1, 1]} : vector<8x512xf32> to vector<8x128xf32>
    %53 = vector.extract_strided_slice %50 {offsets = [0, 256], sizes = [8, 128], strides = [1, 1]} : vector<8x512xf32> to vector<8x128xf32>
    %cst_26 = arith.constant 2.000000e+00 : f32
    %54 = vector.broadcast %cst_26 : f32 to vector<8x128xf32>
    %55 = arith.mulf %54, %53 : vector<8x128xf32>
    %cst_27 = arith.constant 1.000000e+00 : f32
    %56 = vector.broadcast %cst_27 : f32 to vector<8x128xf32>
    %57 = arith.subf %55, %56 : vector<8x128xf32>
    %58 = vector.extract_strided_slice %50 {offsets = [0, 384], sizes = [8, 128], strides = [1, 1]} : vector<8x512xf32> to vector<8x128xf32>
    %59 = arith.mulf %51, %41 : vector<8x128xf32>
    %60 = arith.mulf %52, %57 : vector<8x128xf32>
    %61 = arith.addf %59, %60 : vector<8x128xf32>
    %62 = math.tanh %61 : vector<8x128xf32>
    %63 = arith.mulf %58, %62 : vector<8x128xf32>
    %c16 = arith.constant 16 : index
    %c0_28 = arith.constant 0 : index
    %64 = vector.load %arg11[%c16, %c0_28] : memref<72x512xf32, #tpu.memory_space<vmem>>, vector<8x512xf32>
    %c0_29 = arith.constant 0 : index
    %c0_30 = arith.constant 0 : index
    %65 = vector.load %arg4[%c0_29, %c0_30] : memref<128x512xf32, #tpu.memory_space<vmem>>, vector<128x512xf32>
    %cst_31 = arith.constant dense<0.000000e+00> : vector<8x512xf32>
    %66 = tpu.matmul %63, %65, %cst_31 {dimension_numbers = #tpu.dot_dimension_numbers<[1], [0], [0], [1], [0, 0, 1, 1], [], []>} : vector<8x128xf32>, vector<128x512xf32>, vector<8x512xf32> -> vector<8x512xf32>
    %67 = arith.addf %66, %64 : vector<8x512xf32>
    %68 = arith.negf %67 : vector<8x512xf32>
    %69 = math.exp %68 : vector<8x512xf32>
    %cst_32 = arith.constant 1.000000e+00 : f32
    %70 = vector.broadcast %cst_32 : f32 to vector<8x512xf32>
    %71 = arith.addf %70, %69 : vector<8x512xf32>
    %72 = arith.divf %70, %71 : vector<8x512xf32>
    %73 = vector.extract_strided_slice %72 {offsets = [0, 0], sizes = [8, 128], strides = [1, 1]} : vector<8x512xf32> to vector<8x128xf32>
    %74 = vector.extract_strided_slice %72 {offsets = [0, 128], sizes = [8, 128], strides = [1, 1]} : vector<8x512xf32> to vector<8x128xf32>
    %75 = vector.extract_strided_slice %72 {offsets = [0, 256], sizes = [8, 128], strides = [1, 1]} : vector<8x512xf32> to vector<8x128xf32>
    %cst_33 = arith.constant 2.000000e+00 : f32
    %76 = vector.broadcast %cst_33 : f32 to vector<8x128xf32>
    %77 = arith.mulf %76, %75 : vector<8x128xf32>
    %cst_34 = arith.constant 1.000000e+00 : f32
    %78 = vector.broadcast %cst_34 : f32 to vector<8x128xf32>
    %79 = arith.subf %77, %78 : vector<8x128xf32>
    %80 = vector.extract_strided_slice %72 {offsets = [0, 384], sizes = [8, 128], strides = [1, 1]} : vector<8x512xf32> to vector<8x128xf32>
    %81 = arith.mulf %73, %61 : vector<8x128xf32>
    %82 = arith.mulf %74, %79 : vector<8x128xf32>
    %83 = arith.addf %81, %82 : vector<8x128xf32>
    %84 = math.tanh %83 : vector<8x128xf32>
    %85 = arith.mulf %80, %84 : vector<8x128xf32>
    %c24 = arith.constant 24 : index
    %c0_35 = arith.constant 0 : index
    %86 = vector.load %arg11[%c24, %c0_35] : memref<72x512xf32, #tpu.memory_space<vmem>>, vector<8x512xf32>
    %c0_36 = arith.constant 0 : index
    %c0_37 = arith.constant 0 : index
    %87 = vector.load %arg4[%c0_36, %c0_37] : memref<128x512xf32, #tpu.memory_space<vmem>>, vector<128x512xf32>
    %cst_38 = arith.constant dense<0.000000e+00> : vector<8x512xf32>
    %88 = tpu.matmul %85, %87, %cst_38 {dimension_numbers = #tpu.dot_dimension_numbers<[1], [0], [0], [1], [0, 0, 1, 1], [], []>} : vector<8x128xf32>, vector<128x512xf32>, vector<8x512xf32> -> vector<8x512xf32>
    %89 = arith.addf %88, %86 : vector<8x512xf32>
    %90 = arith.negf %89 : vector<8x512xf32>
    %91 = math.exp %90 : vector<8x512xf32>
    %cst_39 = arith.constant 1.000000e+00 : f32
    %92 = vector.broadcast %cst_39 : f32 to vector<8x512xf32>
    %93 = arith.addf %92, %91 : vector<8x512xf32>
    %94 = arith.divf %92, %93 : vector<8x512xf32>
    %95 = vector.extract_strided_slice %94 {offsets = [0, 0], sizes = [8, 128], strides = [1, 1]} : vector<8x512xf32> to vector<8x128xf32>
    %96 = vector.extract_strided_slice %94 {offsets = [0, 128], sizes = [8, 128], strides = [1, 1]} : vector<8x512xf32> to vector<8x128xf32>
    %97 = vector.extract_strided_slice %94 {offsets = [0, 256], sizes = [8, 128], strides = [1, 1]} : vector<8x512xf32> to vector<8x128xf32>
    %cst_40 = arith.constant 2.000000e+00 : f32
    %98 = vector.broadcast %cst_40 : f32 to vector<8x128xf32>
    %99 = arith.mulf %98, %97 : vector<8x128xf32>
    %cst_41 = arith.constant 1.000000e+00 : f32
    %100 = vector.broadcast %cst_41 : f32 to vector<8x128xf32>
    %101 = arith.subf %99, %100 : vector<8x128xf32>
    %102 = vector.extract_strided_slice %94 {offsets = [0, 384], sizes = [8, 128], strides = [1, 1]} : vector<8x512xf32> to vector<8x128xf32>
    %103 = arith.mulf %95, %83 : vector<8x128xf32>
    %104 = arith.mulf %96, %101 : vector<8x128xf32>
    %105 = arith.addf %103, %104 : vector<8x128xf32>
    %106 = math.tanh %105 : vector<8x128xf32>
    %107 = arith.mulf %102, %106 : vector<8x128xf32>
    %c32 = arith.constant 32 : index
    %c0_42 = arith.constant 0 : index
    %108 = vector.load %arg11[%c32, %c0_42] : memref<72x512xf32, #tpu.memory_space<vmem>>, vector<8x512xf32>
    %c0_43 = arith.constant 0 : index
    %c0_44 = arith.constant 0 : index
    %109 = vector.load %arg4[%c0_43, %c0_44] : memref<128x512xf32, #tpu.memory_space<vmem>>, vector<128x512xf32>
    %cst_45 = arith.constant dense<0.000000e+00> : vector<8x512xf32>
    %110 = tpu.matmul %107, %109, %cst_45 {dimension_numbers = #tpu.dot_dimension_numbers<[1], [0], [0], [1], [0, 0, 1, 1], [], []>} : vector<8x128xf32>, vector<128x512xf32>, vector<8x512xf32> -> vector<8x512xf32>
    %111 = arith.addf %110, %108 : vector<8x512xf32>
    %112 = arith.negf %111 : vector<8x512xf32>
    %113 = math.exp %112 : vector<8x512xf32>
    %cst_46 = arith.constant 1.000000e+00 : f32
    %114 = vector.broadcast %cst_46 : f32 to vector<8x512xf32>
    %115 = arith.addf %114, %113 : vector<8x512xf32>
    %116 = arith.divf %114, %115 : vector<8x512xf32>
    %117 = vector.extract_strided_slice %116 {offsets = [0, 0], sizes = [8, 128], strides = [1, 1]} : vector<8x512xf32> to vector<8x128xf32>
    %118 = vector.extract_strided_slice %116 {offsets = [0, 128], sizes = [8, 128], strides = [1, 1]} : vector<8x512xf32> to vector<8x128xf32>
    %119 = vector.extract_strided_slice %116 {offsets = [0, 256], sizes = [8, 128], strides = [1, 1]} : vector<8x512xf32> to vector<8x128xf32>
    %cst_47 = arith.constant 2.000000e+00 : f32
    %120 = vector.broadcast %cst_47 : f32 to vector<8x128xf32>
    %121 = arith.mulf %120, %119 : vector<8x128xf32>
    %cst_48 = arith.constant 1.000000e+00 : f32
    %122 = vector.broadcast %cst_48 : f32 to vector<8x128xf32>
    %123 = arith.subf %121, %122 : vector<8x128xf32>
    %124 = vector.extract_strided_slice %116 {offsets = [0, 384], sizes = [8, 128], strides = [1, 1]} : vector<8x512xf32> to vector<8x128xf32>
    %125 = arith.mulf %117, %105 : vector<8x128xf32>
    %126 = arith.mulf %118, %123 : vector<8x128xf32>
    %127 = arith.addf %125, %126 : vector<8x128xf32>
    %128 = math.tanh %127 : vector<8x128xf32>
    %129 = arith.mulf %124, %128 : vector<8x128xf32>
    %c40 = arith.constant 40 : index
    %c0_49 = arith.constant 0 : index
    %130 = vector.load %arg11[%c40, %c0_49] : memref<72x512xf32, #tpu.memory_space<vmem>>, vector<8x512xf32>
    %c0_50 = arith.constant 0 : index
    %c0_51 = arith.constant 0 : index
    %131 = vector.load %arg4[%c0_50, %c0_51] : memref<128x512xf32, #tpu.memory_space<vmem>>, vector<128x512xf32>
    %cst_52 = arith.constant dense<0.000000e+00> : vector<8x512xf32>
    %132 = tpu.matmul %129, %131, %cst_52 {dimension_numbers = #tpu.dot_dimension_numbers<[1], [0], [0], [1], [0, 0, 1, 1], [], []>} : vector<8x128xf32>, vector<128x512xf32>, vector<8x512xf32> -> vector<8x512xf32>
    %133 = arith.addf %132, %130 : vector<8x512xf32>
    %134 = arith.negf %133 : vector<8x512xf32>
    %135 = math.exp %134 : vector<8x512xf32>
    %cst_53 = arith.constant 1.000000e+00 : f32
    %136 = vector.broadcast %cst_53 : f32 to vector<8x512xf32>
    %137 = arith.addf %136, %135 : vector<8x512xf32>
    %138 = arith.divf %136, %137 : vector<8x512xf32>
    %139 = vector.extract_strided_slice %138 {offsets = [0, 0], sizes = [8, 128], strides = [1, 1]} : vector<8x512xf32> to vector<8x128xf32>
    %140 = vector.extract_strided_slice %138 {offsets = [0, 128], sizes = [8, 128], strides = [1, 1]} : vector<8x512xf32> to vector<8x128xf32>
    %141 = vector.extract_strided_slice %138 {offsets = [0, 256], sizes = [8, 128], strides = [1, 1]} : vector<8x512xf32> to vector<8x128xf32>
    %cst_54 = arith.constant 2.000000e+00 : f32
    %142 = vector.broadcast %cst_54 : f32 to vector<8x128xf32>
    %143 = arith.mulf %142, %141 : vector<8x128xf32>
    %cst_55 = arith.constant 1.000000e+00 : f32
    %144 = vector.broadcast %cst_55 : f32 to vector<8x128xf32>
    %145 = arith.subf %143, %144 : vector<8x128xf32>
    %146 = vector.extract_strided_slice %138 {offsets = [0, 384], sizes = [8, 128], strides = [1, 1]} : vector<8x512xf32> to vector<8x128xf32>
    %147 = arith.mulf %139, %127 : vector<8x128xf32>
    %148 = arith.mulf %140, %145 : vector<8x128xf32>
    %149 = arith.addf %147, %148 : vector<8x128xf32>
    %150 = math.tanh %149 : vector<8x128xf32>
    %151 = arith.mulf %146, %150 : vector<8x128xf32>
    %c48 = arith.constant 48 : index
    %c0_56 = arith.constant 0 : index
    %152 = vector.load %arg11[%c48, %c0_56] : memref<72x512xf32, #tpu.memory_space<vmem>>, vector<8x512xf32>
    %c0_57 = arith.constant 0 : index
    %c0_58 = arith.constant 0 : index
    %153 = vector.load %arg4[%c0_57, %c0_58] : memref<128x512xf32, #tpu.memory_space<vmem>>, vector<128x512xf32>
    %cst_59 = arith.constant dense<0.000000e+00> : vector<8x512xf32>
    %154 = tpu.matmul %151, %153, %cst_59 {dimension_numbers = #tpu.dot_dimension_numbers<[1], [0], [0], [1], [0, 0, 1, 1], [], []>} : vector<8x128xf32>, vector<128x512xf32>, vector<8x512xf32> -> vector<8x512xf32>
    %155 = arith.addf %154, %152 : vector<8x512xf32>
    %156 = arith.negf %155 : vector<8x512xf32>
    %157 = math.exp %156 : vector<8x512xf32>
    %cst_60 = arith.constant 1.000000e+00 : f32
    %158 = vector.broadcast %cst_60 : f32 to vector<8x512xf32>
    %159 = arith.addf %158, %157 : vector<8x512xf32>
    %160 = arith.divf %158, %159 : vector<8x512xf32>
    %161 = vector.extract_strided_slice %160 {offsets = [0, 0], sizes = [8, 128], strides = [1, 1]} : vector<8x512xf32> to vector<8x128xf32>
    %162 = vector.extract_strided_slice %160 {offsets = [0, 128], sizes = [8, 128], strides = [1, 1]} : vector<8x512xf32> to vector<8x128xf32>
    %163 = vector.extract_strided_slice %160 {offsets = [0, 256], sizes = [8, 128], strides = [1, 1]} : vector<8x512xf32> to vector<8x128xf32>
    %cst_61 = arith.constant 2.000000e+00 : f32
    %164 = vector.broadcast %cst_61 : f32 to vector<8x128xf32>
    %165 = arith.mulf %164, %163 : vector<8x128xf32>
    %cst_62 = arith.constant 1.000000e+00 : f32
    %166 = vector.broadcast %cst_62 : f32 to vector<8x128xf32>
    %167 = arith.subf %165, %166 : vector<8x128xf32>
    %168 = vector.extract_strided_slice %160 {offsets = [0, 384], sizes = [8, 128], strides = [1, 1]} : vector<8x512xf32> to vector<8x128xf32>
    %169 = arith.mulf %161, %149 : vector<8x128xf32>
    %170 = arith.mulf %162, %167 : vector<8x128xf32>
    %171 = arith.addf %169, %170 : vector<8x128xf32>
    %172 = math.tanh %171 : vector<8x128xf32>
    %173 = arith.mulf %168, %172 : vector<8x128xf32>
    %c56 = arith.constant 56 : index
    %c0_63 = arith.constant 0 : index
    %174 = vector.load %arg11[%c56, %c0_63] : memref<72x512xf32, #tpu.memory_space<vmem>>, vector<8x512xf32>
    %c0_64 = arith.constant 0 : index
    %c0_65 = arith.constant 0 : index
    %175 = vector.load %arg4[%c0_64, %c0_65] : memref<128x512xf32, #tpu.memory_space<vmem>>, vector<128x512xf32>
    %cst_66 = arith.constant dense<0.000000e+00> : vector<8x512xf32>
    %176 = tpu.matmul %173, %175, %cst_66 {dimension_numbers = #tpu.dot_dimension_numbers<[1], [0], [0], [1], [0, 0, 1, 1], [], []>} : vector<8x128xf32>, vector<128x512xf32>, vector<8x512xf32> -> vector<8x512xf32>
    %177 = arith.addf %176, %174 : vector<8x512xf32>
    %178 = arith.negf %177 : vector<8x512xf32>
    %179 = math.exp %178 : vector<8x512xf32>
    %cst_67 = arith.constant 1.000000e+00 : f32
    %180 = vector.broadcast %cst_67 : f32 to vector<8x512xf32>
    %181 = arith.addf %180, %179 : vector<8x512xf32>
    %182 = arith.divf %180, %181 : vector<8x512xf32>
    %183 = vector.extract_strided_slice %182 {offsets = [0, 0], sizes = [8, 128], strides = [1, 1]} : vector<8x512xf32> to vector<8x128xf32>
    %184 = vector.extract_strided_slice %182 {offsets = [0, 128], sizes = [8, 128], strides = [1, 1]} : vector<8x512xf32> to vector<8x128xf32>
    %185 = vector.extract_strided_slice %182 {offsets = [0, 256], sizes = [8, 128], strides = [1, 1]} : vector<8x512xf32> to vector<8x128xf32>
    %cst_68 = arith.constant 2.000000e+00 : f32
    %186 = vector.broadcast %cst_68 : f32 to vector<8x128xf32>
    %187 = arith.mulf %186, %185 : vector<8x128xf32>
    %cst_69 = arith.constant 1.000000e+00 : f32
    %188 = vector.broadcast %cst_69 : f32 to vector<8x128xf32>
    %189 = arith.subf %187, %188 : vector<8x128xf32>
    %190 = vector.extract_strided_slice %182 {offsets = [0, 384], sizes = [8, 128], strides = [1, 1]} : vector<8x512xf32> to vector<8x128xf32>
    %191 = arith.mulf %183, %171 : vector<8x128xf32>
    %192 = arith.mulf %184, %189 : vector<8x128xf32>
    %193 = arith.addf %191, %192 : vector<8x128xf32>
    %194 = math.tanh %193 : vector<8x128xf32>
    %195 = arith.mulf %190, %194 : vector<8x128xf32>
    %c64 = arith.constant 64 : index
    %c0_70 = arith.constant 0 : index
    %196 = vector.load %arg11[%c64, %c0_70] : memref<72x512xf32, #tpu.memory_space<vmem>>, vector<8x512xf32>
    %c0_71 = arith.constant 0 : index
    %c0_72 = arith.constant 0 : index
    %197 = vector.load %arg4[%c0_71, %c0_72] : memref<128x512xf32, #tpu.memory_space<vmem>>, vector<128x512xf32>
    %cst_73 = arith.constant dense<0.000000e+00> : vector<8x512xf32>
    %198 = tpu.matmul %195, %197, %cst_73 {dimension_numbers = #tpu.dot_dimension_numbers<[1], [0], [0], [1], [0, 0, 1, 1], [], []>} : vector<8x128xf32>, vector<128x512xf32>, vector<8x512xf32> -> vector<8x512xf32>
    %199 = arith.addf %198, %196 : vector<8x512xf32>
    %200 = arith.negf %199 : vector<8x512xf32>
    %201 = math.exp %200 : vector<8x512xf32>
    %cst_74 = arith.constant 1.000000e+00 : f32
    %202 = vector.broadcast %cst_74 : f32 to vector<8x512xf32>
    %203 = arith.addf %202, %201 : vector<8x512xf32>
    %204 = arith.divf %202, %203 : vector<8x512xf32>
    %205 = vector.extract_strided_slice %204 {offsets = [0, 0], sizes = [8, 128], strides = [1, 1]} : vector<8x512xf32> to vector<8x128xf32>
    %206 = vector.extract_strided_slice %204 {offsets = [0, 128], sizes = [8, 128], strides = [1, 1]} : vector<8x512xf32> to vector<8x128xf32>
    %207 = vector.extract_strided_slice %204 {offsets = [0, 256], sizes = [8, 128], strides = [1, 1]} : vector<8x512xf32> to vector<8x128xf32>
    %cst_75 = arith.constant 2.000000e+00 : f32
    %208 = vector.broadcast %cst_75 : f32 to vector<8x128xf32>
    %209 = arith.mulf %208, %207 : vector<8x128xf32>
    %cst_76 = arith.constant 1.000000e+00 : f32
    %210 = vector.broadcast %cst_76 : f32 to vector<8x128xf32>
    %211 = arith.subf %209, %210 : vector<8x128xf32>
    %212 = vector.extract_strided_slice %204 {offsets = [0, 384], sizes = [8, 128], strides = [1, 1]} : vector<8x512xf32> to vector<8x128xf32>
    %213 = arith.mulf %205, %193 : vector<8x128xf32>
    %214 = arith.mulf %206, %211 : vector<8x128xf32>
    %215 = arith.addf %213, %214 : vector<8x128xf32>
    %216 = math.tanh %215 : vector<8x128xf32>
    %217 = arith.mulf %212, %216 : vector<8x128xf32>
    %218 = arith.select %17, %195, %217 : vector<8x128xi1>, vector<8x128xf32>
    %219 = arith.select %17, %193, %215 : vector<8x128xi1>, vector<8x128xf32>
    %c0_77 = arith.constant 0 : index
    %c0_78 = arith.constant 0 : index
    %220 = vector.load %arg6[%c0_77, %c0_78] : memref<128x24xf32, #tpu.memory_space<vmem>>, vector<128x24xf32>
    %cst_79 = arith.constant dense<0.000000e+00> : vector<8x24xf32>
    %221 = tpu.matmul %218, %220, %cst_79 {dimension_numbers = #tpu.dot_dimension_numbers<[1], [0], [0], [1], [0, 0, 1, 1], [], []>} : vector<8x128xf32>, vector<128x24xf32>, vector<8x24xf32> -> vector<8x24xf32>
    %c0_80 = arith.constant 0 : index
    %c0_81 = arith.constant 0 : index
    %222 = vector.load %arg7[%c0_80, %c0_81] : memref<1x24xf32, #tpu.memory_space<vmem>>, vector<1x24xf32>
    %223 = vector.broadcast %222 : vector<1x24xf32> to vector<8x24xf32>
    %224 = arith.addf %221, %223 : vector<8x24xf32>
    %225 = vector.extract_strided_slice %224 {offsets = [0, 0], sizes = [2, 24], strides = [1, 1]} : vector<8x24xf32> to vector<2x24xf32>
    %c0_82 = arith.constant 0 : index
    %c0_83 = arith.constant 0 : index
    %226 = vector.load %arg8[%c0_82, %c0_83] : memref<2x24xf32, #tpu.memory_space<vmem>>, vector<2x24xf32>
    tpu.vector_store %arg8[%c0_82, %c0_83], %225 {strides = array<i32>} : memref<2x24xf32, #tpu.memory_space<vmem>>, vector<2x24xf32>,
    %227 = vector.extract_strided_slice %218 {offsets = [0, 0], sizes = [2, 64], strides = [1, 1]} : vector<8x128xf32> to vector<2x64xf32>
    %c0_84 = arith.constant 0 : index
    %c0_85 = arith.constant 0 : index
    %228 = vector.load %arg9[%c0_84, %c0_85] : memref<2x64xf32, #tpu.memory_space<vmem>>, vector<2x64xf32>
    tpu.vector_store %arg9[%c0_84, %c0_85], %227 {strides = array<i32>} : memref<2x64xf32, #tpu.memory_space<vmem>>, vector<2x64xf32>,
    %229 = vector.extract_strided_slice %219 {offsets = [0, 0], sizes = [2, 64], strides = [1, 1]} : vector<8x128xf32> to vector<2x64xf32>
    %c0_86 = arith.constant 0 : index
    %c0_87 = arith.constant 0 : index
    %230 = vector.load %arg10[%c0_86, %c0_87] : memref<2x64xf32, #tpu.memory_space<vmem>>, vector<2x64xf32>
    tpu.vector_store %arg10[%c0_86, %c0_87], %229 {strides = array<i32>} : memref<2x64xf32, #tpu.memory_space<vmem>>, vector<2x64xf32>,
    return
  }
}

</mosaic_0001>

<llo_original>
// kernel: vanilla_lstm_forward.1
$region0: #{vanilla_lstm_forward.1}
  #allocation0 [shape = 'u32[]', space=smem, size = 0x4, offset = 0x4, fixed_abs, tag = 'smem constant byte address 0x4 - core index']
  #allocation1 [shape = 'u32[144,128]{1,0:T(1,128)}', space=vmem, size = 0x12000, scoped, tag = 'internal scratch']
  #allocation2 [shape = 'f32[72,512]{1,0:T(8,128)}', space=vmem, size = 0x24000, scoped, tag = 'scratch operand']
  %s0 = inlined_call_operand.vmem [shape: f32[72,48], index: 0, kind: input, shape index: {}]
  %s1 = inlined_call_operand.vmem [shape: f32[2,64], index: 1, kind: input, shape index: {}]
  %s2 = inlined_call_operand.vmem [shape: f32[2,64], index: 2, kind: input, shape index: {}]
  %s3 = inlined_call_operand.vmem [shape: f32[48,512], index: 3, kind: input, shape index: {}]
  %s4 = inlined_call_operand.hbm [shape: f32[128,512], index: 4, kind: input, shape index: {}]
  %s5 = inlined_call_operand.vmem [shape: f32[1,512], index: 5, kind: input, shape index: {}]
  %s6 = inlined_call_operand.vmem [shape: f32[128,24], index: 6, kind: input, shape index: {}]
  %s7 = inlined_call_operand.vmem [shape: f32[1,24], index: 7, kind: input, shape index: {}]
  %s8 = inlined_call_operand.hbm [shape: f32[2,24], index: 8, kind: output, shape index: {0}]
  %s9 = inlined_call_operand.vmem [shape: f32[2,64], index: 9, kind: output, shape index: {1}]
  %s10 = inlined_call_operand.vmem [shape: f32[2,64], index: 10, kind: output, shape index: {2}]
  %11 = xla_tuple %s8, %s9, %s10
  %s12 = sld [smem:[#allocation0]]
  $region62: #{vanilla_lstm_forward.1} parent=0
    _
  %s14 = ssub.s32 1, %s12
  %s15 = scalar_select 0, %s14, %s12
  $region1: #{vanilla_lstm_forward.1} parent=0
    #allocation3 [shape = 'u8[262144]{0}', space=vmem, size = 0x40000, scoped, tag = 'input window, operand 4, single buffered']
    #allocation4 [shape = 's32[1]{0}', space=sflag, size = 0x4, scoped, tag = 'scoped memory for vanilla_lstm_forward.1']
    #allocation5 [shape = 's32[1]{0}', space=sflag, size = 0x4, scoped, tag = 'scoped memory for vanilla_lstm_forward.1']
    #allocation6 [shape = 'u8[1024]{0}', space=vmem, size = 0x400, scoped, tag = 'output window, operand 0, single buffered']
    %16 = vsyncpa [#allocation4], 0
    %17 = vsyncpa [#allocation5], 0
    // Predicated region
    $region2: #{vanilla_lstm_forward.1} parent=1 // pred_check
      _
    $region3: #{vanilla_lstm_forward.1} parent=1 // pred_check_branch
      %19 = sbr.rel (0) target = $region5
    $region4: #{vanilla_lstm_forward.1} parent=1 // pred_region
      _
    $region5: #{vanilla_lstm_forward.1} parent=1 // pred_fallthru
      _
    // Predicated region
    $region6: #{vanilla_lstm_forward.1} parent=1 // pred_check
      _
    $region7: #{vanilla_lstm_forward.1} parent=1 // pred_check_branch
      %21 = sbr.rel (0) target = $region9
    $region8: #{vanilla_lstm_forward.1} parent=1 // pred_region
      _
    $region9: #{vanilla_lstm_forward.1} parent=1 // pred_fallthru
      _
    // Predicated region
    $region10: #{vanilla_lstm_forward.1} parent=1 // pred_check
      _
    $region11: #{vanilla_lstm_forward.1} parent=1 // pred_check_branch
      %23 = sbr.rel (0) target = $region13
    $region12: #{vanilla_lstm_forward.1} parent=1 // pred_region
      _
    $region13: #{vanilla_lstm_forward.1} parent=1 // pred_fallthru
      _
    // Predicated region
    $region14: #{vanilla_lstm_forward.1} parent=1 // pred_check
      _
    $region15: #{vanilla_lstm_forward.1} parent=1 // pred_check_branch
      %25 = sbr.rel (0) target = $region17
    $region16: #{vanilla_lstm_forward.1} parent=1 // pred_region
      _
    $region17: #{vanilla_lstm_forward.1} parent=1 // pred_fallthru
      _
    // Predicated region
    $region18: #{vanilla_lstm_forward.1} parent=1 // pred_check
      _
    $region19: #{vanilla_lstm_forward.1} parent=1 // pred_check_branch
      %27 = sbr.rel (0) target = $region21
    $region20: #{vanilla_lstm_forward.1} parent=1 // pred_region
      %s29 = ssub.s32 8192, 8192
      %30 = vsyncadd [#allocation4], %s29
      %s31 = sshll.u32 [#allocation3], 4
      %s32 = int_to_ptr.vmem [resolvable:$true] %s31
      %37 = dma.hbm_to_vmem [thread:$0]  %s4, 8192, %s32, [#allocation4], 512, 512, 32
    $region21: #{vanilla_lstm_forward.1} parent=1 // pred_fallthru
      _
    // Predicated region
    $region22: #{vanilla_lstm_forward.1} parent=1 // pred_check
      _
    $region23: #{vanilla_lstm_forward.1} parent=1 // pred_check_branch
      %39 = sbr.rel (0) target = $region25
    $region24: #{vanilla_lstm_forward.1} parent=1 // pred_region
      _
    $region25: #{vanilla_lstm_forward.1} parent=1 // pred_fallthru
      _
    // Predicated region
    $region26: #{vanilla_lstm_forward.1} parent=1 // pred_check
      _
    $region27: #{vanilla_lstm_forward.1} parent=1 // pred_check_branch
      %41 = sbr.rel (0) target = $region29
    $region28: #{vanilla_lstm_forward.1} parent=1 // pred_region
      _
    $region29: #{vanilla_lstm_forward.1} parent=1 // pred_fallthru
      _
    // Predicated region
    $region30: #{vanilla_lstm_forward.1} parent=1 // pred_check
      _
    $region31: #{vanilla_lstm_forward.1} parent=1 // pred_check_branch
      %43 = sbr.rel (0) target = $region33
    $region32: #{vanilla_lstm_forward.1} parent=1 // pred_region
      _
    $region33: #{vanilla_lstm_forward.1} parent=1 // pred_fallthru
      _
    // Predicated region
    $region34: #{vanilla_lstm_forward.1} parent=1 // pred_check
      _
    $region35: #{vanilla_lstm_forward.1} parent=1 // pred_check_branch
      %45 = sbr.rel (0) target = $region37
    $region36: #{vanilla_lstm_forward.1} parent=1 // pred_region
      %46 = dma.done [#allocation4], 8192
    $region37: #{vanilla_lstm_forward.1} parent=1 // pred_fallthru
      _
    %v47 = vld [vmem:[%s0] sm:$0xff]
    %v48 = vld [vmem:[%s0 + $0x8] sm:$0xff]
    %v49 = vld [vmem:[%s0 + $0x10] sm:$0xff]
    %v50 = vld [vmem:[%s0 + $0x18] sm:$0xff]
    %v51 = vld [vmem:[%s0 + $0x20] sm:$0xff]
    %v52 = vld [vmem:[%s0 + $0x28] sm:$0xff]
    %v53 = vld [vmem:[%s0 + $0x30] sm:$0xff]
    %v54 = vld [vmem:[%s0 + $0x38] sm:$0xff]
    %v55 = vld [vmem:[%s0 + $0x40] sm:$0xff]
    %v56 = vld [vmem:[%s3] sm:$0xff]
    %v57 = vld [vmem:[%s3 + $0x8] sm:$0xff]
    %v58 = vld [vmem:[%s3 + $0x10] sm:$0xff]
    %v59 = vld [vmem:[%s3 + $0x18] sm:$0xff]
    %v60 = vld [vmem:[%s3 + $0x20] sm:$0xff]
    %v61 = vld [vmem:[%s3 + $0x28] sm:$0xff]
    %v62 = vld [vmem:[%s3 + $0x30] sm:$0xff]
    %v63 = vld [vmem:[%s3 + $0x38] sm:$0xff]
    %v64 = vld [vmem:[%s3 + $0x40] sm:$0xff]
    %v65 = vld [vmem:[%s3 + $0x48] sm:$0xff]
    %v66 = vld [vmem:[%s3 + $0x50] sm:$0xff]
    %v67 = vld [vmem:[%s3 + $0x58] sm:$0xff]
    %v68 = vld [vmem:[%s3 + $0x60] sm:$0xff]
    %v69 = vld [vmem:[%s3 + $0x68] sm:$0xff]
    %v70 = vld [vmem:[%s3 + $0x70] sm:$0xff]
    %v71 = vld [vmem:[%s3 + $0x78] sm:$0xff]
    %v72 = vld [vmem:[%s3 + $0x80] sm:$0xff]
    %v73 = vld [vmem:[%s3 + $0x88] sm:$0xff]
    %v74 = vld [vmem:[%s3 + $0x90] sm:$0xff]
    %v75 = vld [vmem:[%s3 + $0x98] sm:$0xff]
    %v76 = vld [vmem:[%s3 + $0xa0] sm:$0xff]
    %v77 = vld [vmem:[%s3 + $0xa8] sm:$0xff]
    %v78 = vld [vmem:[%s3 + $0xb0] sm:$0xff]
    %v79 = vld [vmem:[%s3 + $0xb8] sm:$0xff]
    %v80 = vld [vmem:[%s5] sm:$0xf]
    %v82 = vlaneseq
    %v83 = vshrl.u32 %v82, 7
    %v84 = vsub.s32 0, %v83
    %v85 = vrot.slane %v80, %v84
    %v86 = vlaneseq
    %v87 = vshrl.u32 %v86, 7
    %v88 = vsub.s32 1, %v87
    %v89 = vrot.slane %v80, %v88
    %v90 = vlaneseq
    %v91 = vshrl.u32 %v90, 7
    %v92 = vsub.s32 2, %v91
    %v93 = vrot.slane %v80, %v92
    %v94 = vlaneseq
    %v95 = vshrl.u32 %v94, 7
    %v96 = vsub.s32 3, %v95
    %v97 = vrot.slane %v80, %v96
    %vm102 = vcmask 392192
    %v104 = vsel %vm102, %v47, 0
    %v107 = vsel %vm102, %v48, 0
    %v110 = vsel %vm102, %v49, 0
    %v113 = vsel %vm102, %v50, 0
    %v116 = vsel %vm102, %v51, 0
    %v119 = vsel %vm102, %v52, 0
    %v122 = vsel %vm102, %v53, 0
    %v125 = vsel %vm102, %v54, 0
    %v128 = vsel %vm102, %v55, 0
    %130 = vmatprep.subr.mxu0 %v57
    %131 = vmatpush1.msra.mxu0 %v56
    %132 = vmatprep.subr.mxu0 %v61
    %133 = vmatpush1.msra.mxu0 %v60
    %134 = vmatprep.subr.mxu0 %v65
    %135 = vmatpush1.msra.mxu0 %v64
    %136 = vmatprep.subr.mxu0 %v69
    %137 = vmatpush1.msra.mxu0 %v68
    %138 = vmatprep.subr.mxu0 %v73
    %139 = vmatpush1.msra.mxu0 %v72
    %140 = vmatprep.subr.mxu0 %v77
    %141 = vmatpush1.msra.mxu0 %v76
    %142 = vmatprep.subr.mxu0 0.0
    %143 = vmatpush1.msra.mxu0 0.0
    %144 = vmatprep.subr.mxu0 0.0
    %145 = vmatpush1.msra.mxu0 0.0
    %146 = vmatprep.subr.mxu0 0.0
    %147 = vmatpush1.msra.mxu0 0.0
    %148 = vmatprep.subr.mxu0 0.0
    %149 = vmatpush1.msra.mxu0 0.0
    %150 = vmatprep.subr.mxu0 0.0
    %151 = vmatpush1.msra.mxu0 0.0
    %152 = vmatprep.subr.mxu0 0.0
    %153 = vmatpush1.msra.mxu0 0.0
    %154 = vmatprep.subr.mxu0 0.0
    %155 = vmatpush1.msra.mxu0 0.0
    %156 = vmatprep.subr.mxu0 0.0
    %157 = vmatpush1.msra.mxu0 0.0
    %158 = vmatprep.subr.mxu0 0.0
    %159 = vmatpush1.msra.mxu0 0.0
    %160 = vmatprep.subr.mxu0 0.0
    %161 = vmatpush1.msra.mxu0 0.0
    %162 = vmatprep.subr.mxu0 0.0
    %163 = vmatpush1.msra.mxu0 0.0
    %164 = vmatprep.subr.mxu0 0.0
    %165 = vmatpush1.msra.mxu0 0.0
    %166 = vmatprep.subr.mxu0 0.0
    %167 = vmatpush1.msra.mxu0 0.0
    %168 = vmatprep.subr.mxu0 0.0
    %169 = vmatpush1.msra.mxu0 0.0
    %170 = vmatprep.subr.mxu0 0.0
    %171 = vmatpush1.msra.mxu0 0.0
    %172 = vmatprep.subr.mxu0 0.0
    %173 = vmatpush1.msra.mxu0 0.0
    %174 = vmatprep.subr.mxu0 0.0
    %175 = vmatpush1.msra.mxu0 0.0
    %176 = vmatprep.subr.mxu0 0.0
    %177 = vmatpush1.msra.mxu0 0.0
    %178 = vmatprep.subr.mxu0 0.0
    %179 = vmatpush1.msra.mxu0 0.0
    %180 = vmatprep.subr.mxu0 0.0
    %181 = vmatpush1.msra.mxu0 0.0
    %182 = vmatprep.subr.mxu0 0.0
    %183 = vmatpush1.msra.mxu0 0.0
    %184 = vmatprep.subr.mxu0 0.0
    %185 = vmatpush1.msra.mxu0 0.0
    %186 = vmatprep.subr.mxu0 0.0
    %187 = vmatpush1.msra.mxu0 0.0
    %188 = vmatprep.subr.mxu0 0.0
    %189 = vmatpush1.msra.mxu0 0.0
    %190 = vmatprep.subr.mxu0 0.0
    %191 = vmatpush1.msra.mxu0 0.0
    %192 = vmatprep.subr.mxu0 0.0
    %193 = vmatpush1.msra.mxu0 0.0
    %194 = vmatprep.mubr.f32.mxu0 0.0
    %195 = vmatmul.mubr.f32.gmra.mrb[0].mxu0 %v104
    %v196 = vpop.f32.mrb[0].mxu0
    %v197 = vadd.f32 %v85, %v196
    %v198 = vpop.f32.mrb[0].mxu0
    %v199 = vadd.f32 %v89, %v198
    %200 = vmatprep.mubr.f32.mxu0 0.0
    %201 = vmatmul.mubr.f32.gmra.mrb[0].mxu0 %v107
    %v202 = vpop.f32.mrb[0].mxu0
    %v203 = vadd.f32 %v85, %v202
    %v204 = vpop.f32.mrb[0].mxu0
    %v205 = vadd.f32 %v89, %v204
    %206 = vmatprep.mubr.f32.mxu0 0.0
    %207 = vmatmul.mubr.f32.gmra.mrb[0].mxu0 %v110
    %v208 = vpop.f32.mrb[0].mxu0
    %v209 = vadd.f32 %v85, %v208
    %v210 = vpop.f32.mrb[0].mxu0
    %v211 = vadd.f32 %v89, %v210
    %212 = vmatprep.mubr.f32.mxu0 0.0
    %213 = vmatmul.mubr.f32.gmra.mrb[0].mxu0 %v113
    %v214 = vpop.f32.mrb[0].mxu0
    %v215 = vadd.f32 %v85, %v214
    %v216 = vpop.f32.mrb[0].mxu0
    %v217 = vadd.f32 %v89, %v216
    %218 = vmatprep.mubr.f32.mxu0 0.0
    %219 = vmatmul.mubr.f32.gmra.mrb[0].mxu0 %v116
    %v220 = vpop.f32.mrb[0].mxu0
    %v221 = vadd.f32 %v85, %v220
    %v222 = vpop.f32.mrb[0].mxu0
    %v223 = vadd.f32 %v89, %v222
    %224 = vmatprep.mubr.f32.mxu0 0.0
    %225 = vmatmul.mubr.f32.gmra.mrb[0].mxu0 %v119
    %v226 = vpop.f32.mrb[0].mxu0
    %v227 = vadd.f32 %v85, %v226
    %v228 = vpop.f32.mrb[0].mxu0
    %v229 = vadd.f32 %v89, %v228
    %230 = vmatprep.mubr.f32.mxu0 0.0
    %231 = vmatmul.mubr.f32.gmra.mrb[0].mxu0 %v122
    %v232 = vpop.f32.mrb[0].mxu0
    %v233 = vadd.f32 %v85, %v232
    %v234 = vpop.f32.mrb[0].mxu0
    %v235 = vadd.f32 %v89, %v234
    %236 = vmatprep.mubr.f32.mxu0 0.0
    %237 = vmatmul.mubr.f32.gmra.mrb[0].mxu0 %v125
    %v238 = vpop.f32.mrb[0].mxu0
    %v239 = vadd.f32 %v85, %v238
    %v240 = vpop.f32.mrb[0].mxu0
    %v241 = vadd.f32 %v89, %v240
    %242 = vmatprep.mubr.f32.mxu0 0.0
    %243 = vmatmul.mubr.f32.gmra.mrb[0].mxu0 %v128
    %v244 = vpop.f32.mrb[0].mxu0
    %v245 = vadd.f32 %v85, %v244
    %v246 = vpop.f32.mrb[0].mxu0
    %v247 = vadd.f32 %v89, %v246
    %248 = vdwg.mxu0
    %249 = vmatprep.subr.mxu0 %v59
    %250 = vmatpush1.msra.mxu0 %v58
    %251 = vmatprep.subr.mxu0 %v63
    %252 = vmatpush1.msra.mxu0 %v62
    %253 = vmatprep.subr.mxu0 %v67
    %254 = vmatpush1.msra.mxu0 %v66
    %255 = vmatprep.subr.mxu0 %v71
    %256 = vmatpush1.msra.mxu0 %v70
    %257 = vmatprep.subr.mxu0 %v75
    %258 = vmatpush1.msra.mxu0 %v74
    %259 = vmatprep.subr.mxu0 %v79
    %260 = vmatpush1.msra.mxu0 %v78
    %261 = vmatprep.subr.mxu0 0.0
    %262 = vmatpush1.msra.mxu0 0.0
    %263 = vmatprep.subr.mxu0 0.0
    %264 = vmatpush1.msra.mxu0 0.0
    %265 = vmatprep.subr.mxu0 0.0
    %266 = vmatpush1.msra.mxu0 0.0
    %267 = vmatprep.subr.mxu0 0.0
    %268 = vmatpush1.msra.mxu0 0.0
    %269 = vmatprep.subr.mxu0 0.0
    %270 = vmatpush1.msra.mxu0 0.0
    %271 = vmatprep.subr.mxu0 0.0
    %272 = vmatpush1.msra.mxu0 0.0
    %273 = vmatprep.subr.mxu0 0.0
    %274 = vmatpush1.msra.mxu0 0.0
    %275 = vmatprep.subr.mxu0 0.0
    %276 = vmatpush1.msra.mxu0 0.0
    %277 = vmatprep.subr.mxu0 0.0
    %278 = vmatpush1.msra.mxu0 0.0
    %279 = vmatprep.subr.mxu0 0.0
    %280 = vmatpush1.msra.mxu0 0.0
    %281 = vmatprep.subr.mxu0 0.0
    %282 = vmatpush1.msra.mxu0 0.0
    %283 = vmatprep.subr.mxu0 0.0
    %284 = vmatpush1.msra.mxu0 0.0
    %285 = vmatprep.subr.mxu0 0.0
    %286 = vmatpush1.msra.mxu0 0.0
    %287 = vmatprep.subr.mxu0 0.0
    %288 = vmatpush1.msra.mxu0 0.0
    %289 = vmatprep.subr.mxu0 0.0
    %290 = vmatpush1.msra.mxu0 0.0
    %291 = vmatprep.subr.mxu0 0.0
    %292 = vmatpush1.msra.mxu0 0.0
    %293 = vmatprep.subr.mxu0 0.0
    %294 = vmatpush1.msra.mxu0 0.0
    %295 = vmatprep.subr.mxu0 0.0
    %296 = vmatpush1.msra.mxu0 0.0
    %297 = vmatprep.subr.mxu0 0.0
    %298 = vmatpush1.msra.mxu0 0.0
    %299 = vmatprep.subr.mxu0 0.0
    %300 = vmatpush1.msra.mxu0 0.0
    %301 = vmatprep.subr.mxu0 0.0
    %302 = vmatpush1.msra.mxu0 0.0
    %303 = vmatprep.subr.mxu0 0.0
    %304 = vmatpush1.msra.mxu0 0.0
    %305 = vmatprep.subr.mxu0 0.0
    %306 = vmatpush1.msra.mxu0 0.0
    %307 = vmatprep.subr.mxu0 0.0
    %308 = vmatpush1.msra.mxu0 0.0
    %309 = vmatprep.subr.mxu0 0.0
    %310 = vmatpush1.msra.mxu0 0.0
    %311 = vmatprep.subr.mxu0 0.0
    %312 = vmatpush1.msra.mxu0 0.0
    %313 = vmatprep.mubr.f32.mxu0 0.0
    %314 = vmatmul.mubr.f32.gmra.mrb[0].mxu0 %v104
    %v315 = vpop.f32.mrb[0].mxu0
    %v316 = vadd.f32 %v93, %v315
    %v317 = vpop.f32.mrb[0].mxu0
    %v318 = vadd.f32 %v97, %v317
    %319 = vmatprep.mubr.f32.mxu0 0.0
    %320 = vmatmul.mubr.f32.gmra.mrb[0].mxu0 %v107
    %v321 = vpop.f32.mrb[0].mxu0
    %v322 = vadd.f32 %v93, %v321
    %v323 = vpop.f32.mrb[0].mxu0
    %v324 = vadd.f32 %v97, %v323
    %325 = vmatprep.mubr.f32.mxu0 0.0
    %326 = vmatmul.mubr.f32.gmra.mrb[0].mxu0 %v110
    %v327 = vpop.f32.mrb[0].mxu0
    %v328 = vadd.f32 %v93, %v327
    %v329 = vpop.f32.mrb[0].mxu0
    %v330 = vadd.f32 %v97, %v329
    %331 = vmatprep.mubr.f32.mxu0 0.0
    %332 = vmatmul.mubr.f32.gmra.mrb[0].mxu0 %v113
    %v333 = vpop.f32.mrb[0].mxu0
    %v334 = vadd.f32 %v93, %v333
    %v335 = vpop.f32.mrb[0].mxu0
    %v336 = vadd.f32 %v97, %v335
    %337 = vmatprep.mubr.f32.mxu0 0.0
    %338 = vmatmul.mubr.f32.gmra.mrb[0].mxu0 %v116
    %v339 = vpop.f32.mrb[0].mxu0
    %v340 = vadd.f32 %v93, %v339
    %v341 = vpop.f32.mrb[0].mxu0
    %v342 = vadd.f32 %v97, %v341
    %343 = vmatprep.mubr.f32.mxu0 0.0
    %344 = vmatmul.mubr.f32.gmra.mrb[0].mxu0 %v119
    %v345 = vpop.f32.mrb[0].mxu0
    %v346 = vadd.f32 %v93, %v345
    %v347 = vpop.f32.mrb[0].mxu0
    %v348 = vadd.f32 %v97, %v347
    %349 = vmatprep.mubr.f32.mxu0 0.0
    %350 = vmatmul.mubr.f32.gmra.mrb[0].mxu0 %v122
    %v351 = vpop.f32.mrb[0].mxu0
    %v352 = vadd.f32 %v93, %v351
    %v353 = vpop.f32.mrb[0].mxu0
    %v354 = vadd.f32 %v97, %v353
    %355 = vmatprep.mubr.f32.mxu0 0.0
    %356 = vmatmul.mubr.f32.gmra.mrb[0].mxu0 %v125
    %v357 = vpop.f32.mrb[0].mxu0
    %v358 = vadd.f32 %v93, %v357
    %v359 = vpop.f32.mrb[0].mxu0
    %v360 = vadd.f32 %v97, %v359
    %361 = vmatprep.mubr.f32.mxu0 0.0
    %362 = vmatmul.mubr.f32.gmra.mrb[0].mxu0 %v128
    %v363 = vpop.f32.mrb[0].mxu0
    %v364 = vadd.f32 %v93, %v363
    %v365 = vpop.f32.mrb[0].mxu0
    %v366 = vadd.f32 %v97, %v365
    %367 = vdwg.mxu0
    %368 = vst [vmem:[#allocation2] sm:$0xff] %v197
    %369 = vst [vmem:[#allocation2 + $0x8] sm:$0xff] %v199
    %370 = vst [vmem:[#allocation2 + $0x10] sm:$0xff] %v316
    %371 = vst [vmem:[#allocation2 + $0x18] sm:$0xff] %v318
    %372 = vst [vmem:[#allocation2 + $0x20] sm:$0xff] %v203
    %373 = vst [vmem:[#allocation2 + $0x28] sm:$0xff] %v205
    %374 = vst [vmem:[#allocation2 + $0x30] sm:$0xff] %v322
    %375 = vst [vmem:[#allocation2 + $0x38] sm:$0xff] %v324
    %376 = vst [vmem:[#allocation2 + $0x40] sm:$0xff] %v209
    %377 = vst [vmem:[#allocation2 + $0x48] sm:$0xff] %v211
    %378 = vst [vmem:[#allocation2 + $0x50] sm:$0xff] %v328
    %379 = vst [vmem:[#allocation2 + $0x58] sm:$0xff] %v330
    %380 = vst [vmem:[#allocation2 + $0x60] sm:$0xff] %v215
    %381 = vst [vmem:[#allocation2 + $0x68] sm:$0xff] %v217
    %382 = vst [vmem:[#allocation2 + $0x70] sm:$0xff] %v334
    %383 = vst [vmem:[#allocation2 + $0x78] sm:$0xff] %v336
    %384 = vst [vmem:[#allocation2 + $0x80] sm:$0xff] %v221
    %385 = vst [vmem:[#allocation2 + $0x88] sm:$0xff] %v223
    %386 = vst [vmem:[#allocation2 + $0x90] sm:$0xff] %v340
    %387 = vst [vmem:[#allocation2 + $0x98] sm:$0xff] %v342
    %388 = vst [vmem:[#allocation2 + $0xa0] sm:$0xff] %v227
    %389 = vst [vmem:[#allocation2 + $0xa8] sm:$0xff] %v229
    %390 = vst [vmem:[#allocation2 + $0xb0] sm:$0xff] %v346
    %391 = vst [vmem:[#allocation2 + $0xb8] sm:$0xff] %v348
    %392 = vst [vmem:[#allocation2 + $0xc0] sm:$0xff] %v233
    %393 = vst [vmem:[#allocation2 + $0xc8] sm:$0xff] %v235
    %394 = vst [vmem:[#allocation2 + $0xd0] sm:$0xff] %v352
    %395 = vst [vmem:[#allocation2 + $0xd8] sm:$0xff] %v354
    %396 = vst [vmem:[#allocation2 + $0xe0] sm:$0xff] %v239
    %397 = vst [vmem:[#allocation2 + $0xe8] sm:$0xff] %v241
    %398 = vst [vmem:[#allocation2 + $0xf0] sm:$0xff] %v358
    %399 = vst [vmem:[#allocation2 + $0xf8] sm:$0xff] %v360
    %400 = vst [vmem:[#allocation2 + $0x100] sm:$0xff] %v245
    %401 = vst [vmem:[#allocation2 + $0x108] sm:$0xff] %v247
    %402 = vst [vmem:[#allocation2 + $0x110] sm:$0xff] %v364
    %403 = vst [vmem:[#allocation2 + $0x118] sm:$0xff] %v366
    %v404 = vld [vmem:[%s1] sm:$0x3]
    %vm405 = vcmask 523264
    %v406 = vsel %vm405, %v404, 0.0
    %v407 = vld [vmem:[%s2] sm:$0x3]
    %v408 = vsel %vm405, %v407, 0.0
    %vm409 = vcmask 1041408
    %v410 = vsel %vm409, %v406, 0.0
    %v411 = vsel %vm409, %v408, 0.0
    %v412 = vlaneseq
    %v413 = vand.u32 %v412, 127
    %vm414 = vcmp.lt.s32.totalorder %v413, 32
    %v415 = vld [vmem:[#allocation2] sm:$0xff]
    %v416 = vld [vmem:[#allocation2 + $0x8] sm:$0xff]
    %v417 = vld [vmem:[#allocation2 + $0x10] sm:$0xff]
    %v418 = vld [vmem:[#allocation2 + $0x18] sm:$0xff]
    %v419 = vld [vmem:[#allocation3] sm:$0xff]
    %v420 = vld [vmem:[#allocation3 + $0x8] sm:$0xff]
    %v421 = vld [vmem:[#allocation3 + $0x10] sm:$0xff]
    %v422 = vld [vmem:[#allocation3 + $0x18] sm:$0xff]
    %v423 = vld [vmem:[#allocation3 + $0x20] sm:$0xff]
    %v424 = vld [vmem:[#allocation3 + $0x28] sm:$0xff]
    %v425 = vld [vmem:[#allocation3 + $0x30] sm:$0xff]
    %v426 = vld [vmem:[#allocation3 + $0x38] sm:$0xff]
    %v427 = vld [vmem:[#allocation3 + $0x40] sm:$0xff]
    %v428 = vld [vmem:[#allocation3 + $0x48] sm:$0xff]
    %v429 = vld [vmem:[#allocation3 + $0x50] sm:$0xff]
    %v430 = vld [vmem:[#allocation3 + $0x58] sm:$0xff]
    %v431 = vld [vmem:[#allocation3 + $0x60] sm:$0xff]
    %v432 = vld [vmem:[#allocation3 + $0x68] sm:$0xff]
    %v433 = vld [vmem:[#allocation3 + $0x70] sm:$0xff]
    %v434 = vld [vmem:[#allocation3 + $0x78] sm:$0xff]
    %v435 = vld [vmem:[#allocation3 + $0x80] sm:$0xff]
    %v436 = vld [vmem:[#allocation3 + $0x88] sm:$0xff]
    %v437 = vld [vmem:[#allocation3 + $0x90] sm:$0xff]
    %v438 = vld [vmem:[#allocation3 + $0x98] sm:$0xff]
    %v439 = vld [vmem:[#allocation3 + $0xa0] sm:$0xff]
    %v440 = vld [vmem:[#allocation3 + $0xa8] sm:$0xff]
    %v441 = vld [vmem:[#allocation3 + $0xb0] sm:$0xff]
    %v442 = vld [vmem:[#allocation3 + $0xb8] sm:$0xff]
    %v443 = vld [vmem:[#allocation3 + $0xc0] sm:$0xff]
    %v444 = vld [vmem:[#allocation3 + $0xc8] sm:$0xff]
    %v445 = vld [vmem:[#allocation3 + $0xd0] sm:$0xff]
    %v446 = vld [vmem:[#allocation3 + $0xd8] sm:$0xff]
    %v447 = vld [vmem:[#allocation3 + $0xe0] sm:$0xff]
    %v448 = vld [vmem:[#allocation3 + $0xe8] sm:$0xff]
    %v449 = vld [vmem:[#allocation3 + $0xf0] sm:$0xff]
    %v450 = vld [vmem:[#allocation3 + $0xf8] sm:$0xff]
    %v451 = vld [vmem:[#allocation3 + $0x100] sm:$0xff]
    %v452 = vld [vmem:[#allocation3 + $0x108] sm:$0xff]
    %v453 = vld [vmem:[#allocation3 + $0x110] sm:$0xff]
    %v454 = vld [vmem:[#allocation3 + $0x118] sm:$0xff]
    %v455 = vld [vmem:[#allocation3 + $0x120] sm:$0xff]
    %v456 = vld [vmem:[#allocation3 + $0x128] sm:$0xff]
    %v457 = vld [vmem:[#allocation3 + $0x130] sm:$0xff]
    %v458 = vld [vmem:[#allocation3 + $0x138] sm:$0xff]
    %v459 = vld [vmem:[#allocation3 + $0x140] sm:$0xff]
    %v460 = vld [vmem:[#allocation3 + $0x148] sm:$0xff]
    %v461 = vld [vmem:[#allocation3 + $0x150] sm:$0xff]
    %v462 = vld [vmem:[#allocation3 + $0x158] sm:$0xff]
    %v463 = vld [vmem:[#allocation3 + $0x160] sm:$0xff]
    %v464 = vld [vmem:[#allocation3 + $0x168] sm:$0xff]
    %v465 = vld [vmem:[#allocation3 + $0x170] sm:$0xff]
    %v466 = vld [vmem:[#allocation3 + $0x178] sm:$0xff]
    %v467 = vld [vmem:[#allocation3 + $0x180] sm:$0xff]
    %v468 = vld [vmem:[#allocation3 + $0x188] sm:$0xff]
    %v469 = vld [vmem:[#allocation3 + $0x190] sm:$0xff]
    %v470 = vld [vmem:[#allocation3 + $0x198] sm:$0xff]
    %v471 = vld [vmem:[#allocation3 + $0x1a0] sm:$0xff]
    %v472 = vld [vmem:[#allocation3 + $0x1a8] sm:$0xff]
    %v473 = vld [vmem:[#allocation3 + $0x1b0] sm:$0xff]
    %v474 = vld [vmem:[#allocation3 + $0x1b8] sm:$0xff]
    %v475 = vld [vmem:[#allocation3 + $0x1c0] sm:$0xff]
    %v476 = vld [vmem:[#allocation3 + $0x1c8] sm:$0xff]
    %v477 = vld [vmem:[#allocation3 + $0x1d0] sm:$0xff]
    %v478 = vld [vmem:[#allocation3 + $0x1d8] sm:$0xff]
    %v479 = vld [vmem:[#allocation3 + $0x1e0] sm:$0xff]
    %v480 = vld [vmem:[#allocation3 + $0x1e8] sm:$0xff]
    %v481 = vld [vmem:[#allocation3 + $0x1f0] sm:$0xff]
    %v482 = vld [vmem:[#allocation3 + $0x1f8] sm:$0xff]
    %483 = vmatprep.subr.mxu0 %v420
    %484 = vmatpush1.msra.mxu0 %v419
    %485 = vmatprep.subr.mxu0 %v424
    %486 = vmatpush1.msra.mxu0 %v423
    %487 = vmatprep.subr.mxu0 %v428
    %488 = vmatpush1.msra.mxu0 %v427
    %489 = vmatprep.subr.mxu0 %v432
    %490 = vmatpush1.msra.mxu0 %v431
    %491 = vmatprep.subr.mxu0 %v436
    %492 = vmatpush1.msra.mxu0 %v435
    %493 = vmatprep.subr.mxu0 %v440
    %494 = vmatpush1.msra.mxu0 %v439
    %495 = vmatprep.subr.mxu0 %v444
    %496 = vmatpush1.msra.mxu0 %v443
    %497 = vmatprep.subr.mxu0 %v448
    %498 = vmatpush1.msra.mxu0 %v447
    %499 = vmatprep.subr.mxu0 %v452
    %500 = vmatpush1.msra.mxu0 %v451
    %501 = vmatprep.subr.mxu0 %v456
    %502 = vmatpush1.msra.mxu0 %v455
    %503 = vmatprep.subr.mxu0 %v460
    %504 = vmatpush1.msra.mxu0 %v459
    %505 = vmatprep.subr.mxu0 %v464
    %506 = vmatpush1.msra.mxu0 %v463
    %507 = vmatprep.subr.mxu0 %v468
    %508 = vmatpush1.msra.mxu0 %v467
    %509 = vmatprep.subr.mxu0 %v472
    %510 = vmatpush1.msra.mxu0 %v471
    %511 = vmatprep.subr.mxu0 %v476
    %512 = vmatpush1.msra.mxu0 %v475
    %513 = vmatprep.subr.mxu0 %v480
    %514 = vmatpush1.msra.mxu0 %v479
    %515 = vmatprep.subr.mxu0 0.0
    %516 = vmatpush1.msra.mxu0 0.0
    %517 = vmatprep.subr.mxu0 0.0
    %518 = vmatpush1.msra.mxu0 0.0
    %519 = vmatprep.subr.mxu0 0.0
    %520 = vmatpush1.msra.mxu0 0.0
    %521 = vmatprep.subr.mxu0 0.0
    %522 = vmatpush1.msra.mxu0 0.0
    %523 = vmatprep.subr.mxu0 0.0
    %524 = vmatpush1.msra.mxu0 0.0
    %525 = vmatprep.subr.mxu0 0.0
    %526 = vmatpush1.msra.mxu0 0.0
    %527 = vmatprep.subr.mxu0 0.0
    %528 = vmatpush1.msra.mxu0 0.0
    %529 = vmatprep.subr.mxu0 0.0
    %530 = vmatpush1.msra.mxu0 0.0
    %531 = vmatprep.subr.mxu0 0.0
    %532 = vmatpush1.msra.mxu0 0.0
    %533 = vmatprep.subr.mxu0 0.0
    %534 = vmatpush1.msra.mxu0 0.0
    %535 = vmatprep.subr.mxu0 0.0
    %536 = vmatpush1.msra.mxu0 0.0
    %537 = vmatprep.subr.mxu0 0.0
    %538 = vmatpush1.msra.mxu0 0.0
    %539 = vmatprep.subr.mxu0 0.0
    %540 = vmatpush1.msra.mxu0 0.0
    %541 = vmatprep.subr.mxu0 0.0
    %542 = vmatpush1.msra.mxu0 0.0
    %543 = vmatprep.subr.mxu0 0.0
    %544 = vmatpush1.msra.mxu0 0.0
    %545 = vmatprep.subr.mxu0 0.0
    %546 = vmatpush1.msra.mxu0 0.0
    %547 = vmatprep.mubr.f32.mxu0 0.0
    %548 = vmatmul.mubr.f32.gmra.mrb[0].mxu0 %v410
    %v549 = vpop.f32.mrb[0].mxu0
    %v550 = vadd.f32 %v415, %v549
    %v551 = vpop.f32.mrb[0].mxu0
    %v552 = vadd.f32 %v416, %v551
    %553 = vdwg.mxu0
    %554 = vmatprep.subr.mxu0 %v422
    %555 = vmatpush1.msra.mxu0 %v421
    %556 = vmatprep.subr.mxu0 %v426
    %557 = vmatpush1.msra.mxu0 %v425
    %558 = vmatprep.subr.mxu0 %v430
    %559 = vmatpush1.msra.mxu0 %v429
    %560 = vmatprep.subr.mxu0 %v434
    %561 = vmatpush1.msra.mxu0 %v433
    %562 = vmatprep.subr.mxu0 %v438
    %563 = vmatpush1.msra.mxu0 %v437
    %564 = vmatprep.subr.mxu0 %v442
    %565 = vmatpush1.msra.mxu0 %v441
    %566 = vmatprep.subr.mxu0 %v446
    %567 = vmatpush1.msra.mxu0 %v445
    %568 = vmatprep.subr.mxu0 %v450
    %569 = vmatpush1.msra.mxu0 %v449
    %570 = vmatprep.subr.mxu0 %v454
    %571 = vmatpush1.msra.mxu0 %v453
    %572 = vmatprep.subr.mxu0 %v458
    %573 = vmatpush1.msra.mxu0 %v457
    %574 = vmatprep.subr.mxu0 %v462
    %575 = vmatpush1.msra.mxu0 %v461
    %576 = vmatprep.subr.mxu0 %v466
    %577 = vmatpush1.msra.mxu0 %v465
    %578 = vmatprep.subr.mxu0 %v470
    %579 = vmatpush1.msra.mxu0 %v469
    %580 = vmatprep.subr.mxu0 %v474
    %581 = vmatpush1.msra.mxu0 %v473
    %582 = vmatprep.subr.mxu0 %v478
    %583 = vmatpush1.msra.mxu0 %v477
    %584 = vmatprep.subr.mxu0 %v482
    %585 = vmatpush1.msra.mxu0 %v481
    %586 = vmatprep.subr.mxu0 0.0
    %587 = vmatpush1.msra.mxu0 0.0
    %588 = vmatprep.subr.mxu0 0.0
    %589 = vmatpush1.msra.mxu0 0.0
    %590 = vmatprep.subr.mxu0 0.0
    %591 = vmatpush1.msra.mxu0 0.0
    %592 = vmatprep.subr.mxu0 0.0
    %593 = vmatpush1.msra.mxu0 0.0
    %594 = vmatprep.subr.mxu0 0.0
    %595 = vmatpush1.msra.mxu0 0.0
    %596 = vmatprep.subr.mxu0 0.0
    %597 = vmatpush1.msra.mxu0 0.0
    %598 = vmatprep.subr.mxu0 0.0
    %599 = vmatpush1.msra.mxu0 0.0
    %600 = vmatprep.subr.mxu0 0.0
    %601 = vmatpush1.msra.mxu0 0.0
    %602 = vmatprep.subr.mxu0 0.0
    %603 = vmatpush1.msra.mxu0 0.0
    %604 = vmatprep.subr.mxu0 0.0
    %605 = vmatpush1.msra.mxu0 0.0
    %606 = vmatprep.subr.mxu0 0.0
    %607 = vmatpush1.msra.mxu0 0.0
    %608 = vmatprep.subr.mxu0 0.0
    %609 = vmatpush1.msra.mxu0 0.0
    %610 = vmatprep.subr.mxu0 0.0
    %611 = vmatpush1.msra.mxu0 0.0
    %612 = vmatprep.subr.mxu0 0.0
    %613 = vmatpush1.msra.mxu0 0.0
    %614 = vmatprep.subr.mxu0 0.0
    %615 = vmatpush1.msra.mxu0 0.0
    %616 = vmatprep.subr.mxu0 0.0
    %617 = vmatpush1.msra.mxu0 0.0
    %618 = vmatprep.mubr.f32.mxu0 0.0
    %619 = vmatmul.mubr.f32.gmra.mrb[0].mxu0 %v410
    %v620 = vpop.f32.mrb[0].mxu0
    %v621 = vadd.f32 %v417, %v620
    %v622 = vpop.f32.mrb[0].mxu0
    %v623 = vadd.f32 %v418, %v622
    %624 = vdwg.mxu0
    %v625 = vxor.u32 %v550, 2147483648
    %v626 = vxor.u32 %v552, 2147483648
    %v627 = vxor.u32 %v621, 2147483648
    %v628 = vxor.u32 %v623, 2147483648
    %v629 = vmul.f32 %v625, 1.442695
    %v630 = vpow.pop %v629
    %v631 = vmul.f32 %v626, 1.442695
    %v632 = vpow.pop %v631
    %v633 = vmul.f32 %v627, 1.442695
    %v634 = vpow.pop %v633
    %v635 = vmul.f32 %v628, 1.442695
    %v636 = vpow.pop %v635
    %v637 = vadd.f32 %v630, 1.0
    %v638 = vadd.f32 %v632, 1.0
    %v639 = vadd.f32 %v634, 1.0
    %v640 = vadd.f32 %v636, 1.0
    %v641 = vrcp.pop %v637
    %v642 = vmul.f32 1.0, %v641
    %v643 = vrcp.pop %v638
    %v644 = vmul.f32 1.0, %v643
    %v645 = vrcp.pop %v639
    %v646 = vmul.f32 1.0, %v645
    %v647 = vrcp.pop %v640
    %v648 = vmul.f32 1.0, %v647
    %v649 = vmul.f32 %v646, 2.0
    %v650 = vsub.f32 %v649, 1.0
    %v651 = vmul.f32 %v642, %v411
    %v652 = vmul.f32 %v644, %v650
    %v653 = vadd.f32 %v651, %v652
    %v654 = vtanh.pop %v653
    %v655 = vmul.f32 %v648, %v654
    %v656 = vsel %vm414, %v655, %v410
    %v657 = vsel %vm414, %v653, %v411
    %v658 = vld [vmem:[#allocation2 + $0x20] sm:$0xff]
    %v659 = vld [vmem:[#allocation2 + $0x28] sm:$0xff]
    %v660 = vld [vmem:[#allocation2 + $0x30] sm:$0xff]
    %v661 = vld [vmem:[#allocation2 + $0x38] sm:$0xff]
    %662 = vmatprep.subr.mxu0 %v420
    %663 = vmatpush1.msra.mxu0 %v419
    %664 = vmatprep.subr.mxu0 %v424
    %665 = vmatpush1.msra.mxu0 %v423
    %666 = vmatprep.subr.mxu0 %v428
    %667 = vmatpush1.msra.mxu0 %v427
    %668 = vmatprep.subr.mxu0 %v432
    %669 = vmatpush1.msra.mxu0 %v431
    %670 = vmatprep.subr.mxu0 %v436
    %671 = vmatpush1.msra.mxu0 %v435
    %672 = vmatprep.subr.mxu0 %v440
    %673 = vmatpush1.msra.mxu0 %v439
    %674 = vmatprep.subr.mxu0 %v444
    %675 = vmatpush1.msra.mxu0 %v443
    %676 = vmatprep.subr.mxu0 %v448
    %677 = vmatpush1.msra.mxu0 %v447
    %678 = vmatprep.subr.mxu0 %v452
    %679 = vmatpush1.msra.mxu0 %v451
    %680 = vmatprep.subr.mxu0 %v456
    %681 = vmatpush1.msra.mxu0 %v455
    %682 = vmatprep.subr.mxu0 %v460
    %683 = vmatpush1.msra.mxu0 %v459
    %684 = vmatprep.subr.mxu0 %v464
    %685 = vmatpush1.msra.mxu0 %v463
    %686 = vmatprep.subr.mxu0 %v468
    %687 = vmatpush1.msra.mxu0 %v467
    %688 = vmatprep.subr.mxu0 %v472
    %689 = vmatpush1.msra.mxu0 %v471
    %690 = vmatprep.subr.mxu0 %v476
    %691 = vmatpush1.msra.mxu0 %v475
    %692 = vmatprep.subr.mxu0 %v480
    %693 = vmatpush1.msra.mxu0 %v479
    %694 = vmatprep.subr.mxu0 0.0
    %695 = vmatpush1.msra.mxu0 0.0
    %696 = vmatprep.subr.mxu0 0.0
    %697 = vmatpush1.msra.mxu0 0.0
    %698 = vmatprep.subr.mxu0 0.0
    %699 = vmatpush1.msra.mxu0 0.0
    %700 = vmatprep.subr.mxu0 0.0
    %701 = vmatpush1.msra.mxu0 0.0
    %702 = vmatprep.subr.mxu0 0.0
    %703 = vmatpush1.msra.mxu0 0.0
    %704 = vmatprep.subr.mxu0 0.0
    %705 = vmatpush1.msra.mxu0 0.0
    %706 = vmatprep.subr.mxu0 0.0
    %707 = vmatpush1.msra.mxu0 0.0
    %708 = vmatprep.subr.mxu0 0.0
    %709 = vmatpush1.msra.mxu0 0.0
    %710 = vmatprep.subr.mxu0 0.0
    %711 = vmatpush1.msra.mxu0 0.0
    %712 = vmatprep.subr.mxu0 0.0
    %713 = vmatpush1.msra.mxu0 0.0
    %714 = vmatprep.subr.mxu0 0.0
    %715 = vmatpush1.msra.mxu0 0.0
    %716 = vmatprep.subr.mxu0 0.0
    %717 = vmatpush1.msra.mxu0 0.0
    %718 = vmatprep.subr.mxu0 0.0
    %719 = vmatpush1.msra.mxu0 0.0
    %720 = vmatprep.subr.mxu0 0.0
    %721 = vmatpush1.msra.mxu0 0.0
    %722 = vmatprep.subr.mxu0 0.0
    %723 = vmatpush1.msra.mxu0 0.0
    %724 = vmatprep.subr.mxu0 0.0
    %725 = vmatpush1.msra.mxu0 0.0
    %726 = vmatprep.mubr.f32.mxu0 0.0
    %727 = vmatmul.mubr.f32.gmra.mrb[0].mxu0 %v656
    %v728 = vpop.f32.mrb[0].mxu0
    %v729 = vadd.f32 %v658, %v728
    %v730 = vpop.f32.mrb[0].mxu0
    %v731 = vadd.f32 %v659, %v730
    %732 = vdwg.mxu0
    %733 = vmatprep.subr.mxu0 %v422
    %734 = vmatpush1.msra.mxu0 %v421
    %735 = vmatprep.subr.mxu0 %v426
    %736 = vmatpush1.msra.mxu0 %v425
    %737 = vmatprep.subr.mxu0 %v430
    %738 = vmatpush1.msra.mxu0 %v429
    %739 = vmatprep.subr.mxu0 %v434
    %740 = vmatpush1.msra.mxu0 %v433
    %741 = vmatprep.subr.mxu0 %v438
    %742 = vmatpush1.msra.mxu0 %v437
    %743 = vmatprep.subr.mxu0 %v442
    %744 = vmatpush1.msra.mxu0 %v441
    %745 = vmatprep.subr.mxu0 %v446
    %746 = vmatpush1.msra.mxu0 %v445
    %747 = vmatprep.subr.mxu0 %v450
    %748 = vmatpush1.msra.mxu0 %v449
    %749 = vmatprep.subr.mxu0 %v454
    %750 = vmatpush1.msra.mxu0 %v453
    %751 = vmatprep.subr.mxu0 %v458
    %752 = vmatpush1.msra.mxu0 %v457
    %753 = vmatprep.subr.mxu0 %v462
    %754 = vmatpush1.msra.mxu0 %v461
    %755 = vmatprep.subr.mxu0 %v466
    %756 = vmatpush1.msra.mxu0 %v465
    %757 = vmatprep.subr.mxu0 %v470
    %758 = vmatpush1.msra.mxu0 %v469
    %759 = vmatprep.subr.mxu0 %v474
    %760 = vmatpush1.msra.mxu0 %v473
    %761 = vmatprep.subr.mxu0 %v478
    %762 = vmatpush1.msra.mxu0 %v477
    %763 = vmatprep.subr.mxu0 %v482
    %764 = vmatpush1.msra.mxu0 %v481
    %765 = vmatprep.subr.mxu0 0.0
    %766 = vmatpush1.msra.mxu0 0.0
    %767 = vmatprep.subr.mxu0 0.0
    %768 = vmatpush1.msra.mxu0 0.0
    %769 = vmatprep.subr.mxu0 0.0
    %770 = vmatpush1.msra.mxu0 0.0
    %771 = vmatprep.subr.mxu0 0.0
    %772 = vmatpush1.msra.mxu0 0.0
    %773 = vmatprep.subr.mxu0 0.0
    %774 = vmatpush1.msra.mxu0 0.0
    %775 = vmatprep.subr.mxu0 0.0
    %776 = vmatpush1.msra.mxu0 0.0
    %777 = vmatprep.subr.mxu0 0.0
    %778 = vmatpush1.msra.mxu0 0.0
    %779 = vmatprep.subr.mxu0 0.0
    %780 = vmatpush1.msra.mxu0 0.0
    %781 = vmatprep.subr.mxu0 0.0
    %782 = vmatpush1.msra.mxu0 0.0
    %783 = vmatprep.subr.mxu0 0.0
    %784 = vmatpush1.msra.mxu0 0.0
    %785 = vmatprep.subr.mxu0 0.0
    %786 = vmatpush1.msra.mxu0 0.0
    %787 = vmatprep.subr.mxu0 0.0
    %788 = vmatpush1.msra.mxu0 0.0
    %789 = vmatprep.subr.mxu0 0.0
    %790 = vmatpush1.msra.mxu0 0.0
    %791 = vmatprep.subr.mxu0 0.0
    %792 = vmatpush1.msra.mxu0 0.0
    %793 = vmatprep.subr.mxu0 0.0
    %794 = vmatpush1.msra.mxu0 0.0
    %795 = vmatprep.subr.mxu0 0.0
    %796 = vmatpush1.msra.mxu0 0.0
    %797 = vmatprep.mubr.f32.mxu0 0.0
    %798 = vmatmul.mubr.f32.gmra.mrb[0].mxu0 %v656
    %v799 = vpop.f32.mrb[0].mxu0
    %v800 = vadd.f32 %v660, %v799
    %v801 = vpop.f32.mrb[0].mxu0
    %v802 = vadd.f32 %v661, %v801
    %803 = vdwg.mxu0
    %v804 = vxor.u32 %v729, 2147483648
    %v805 = vxor.u32 %v731, 2147483648
    %v806 = vxor.u32 %v800, 2147483648
    %v807 = vxor.u32 %v802, 2147483648
    %v808 = vmul.f32 %v804, 1.442695
    %v809 = vpow.pop %v808
    %v810 = vmul.f32 %v805, 1.442695
    %v811 = vpow.pop %v810
    %v812 = vmul.f32 %v806, 1.442695
    %v813 = vpow.pop %v812
    %v814 = vmul.f32 %v807, 1.442695
    %v815 = vpow.pop %v814
    %v816 = vadd.f32 %v809, 1.0
    %v817 = vadd.f32 %v811, 1.0
    %v818 = vadd.f32 %v813, 1.0
    %v819 = vadd.f32 %v815, 1.0
    %v820 = vrcp.pop %v816
    %v821 = vmul.f32 1.0, %v820
    %v822 = vrcp.pop %v817
    %v823 = vmul.f32 1.0, %v822
    %v824 = vrcp.pop %v818
    %v825 = vmul.f32 1.0, %v824
    %v826 = vrcp.pop %v819
    %v827 = vmul.f32 1.0, %v826
    %v828 = vmul.f32 %v825, 2.0
    %v829 = vsub.f32 %v828, 1.0
    %v830 = vmul.f32 %v821, %v657
    %v831 = vmul.f32 %v823, %v829
    %v832 = vadd.f32 %v830, %v831
    %v833 = vtanh.pop %v832
    %v834 = vmul.f32 %v827, %v833
    %v835 = vld [vmem:[#allocation2 + $0x40] sm:$0xff]
    %v836 = vld [vmem:[#allocation2 + $0x48] sm:$0xff]
    %v837 = vld [vmem:[#allocation2 + $0x50] sm:$0xff]
    %v838 = vld [vmem:[#allocation2 + $0x58] sm:$0xff]
    %839 = vmatprep.subr.mxu0 %v420
    %840 = vmatpush1.msra.mxu0 %v419
    %841 = vmatprep.subr.mxu0 %v424
    %842 = vmatpush1.msra.mxu0 %v423
    %843 = vmatprep.subr.mxu0 %v428
    %844 = vmatpush1.msra.mxu0 %v427
    %845 = vmatprep.subr.mxu0 %v432
    %846 = vmatpush1.msra.mxu0 %v431
    %847 = vmatprep.subr.mxu0 %v436
    %848 = vmatpush1.msra.mxu0 %v435
    %849 = vmatprep.subr.mxu0 %v440
    %850 = vmatpush1.msra.mxu0 %v439
    %851 = vmatprep.subr.mxu0 %v444
    %852 = vmatpush1.msra.mxu0 %v443
    %853 = vmatprep.subr.mxu0 %v448
    %854 = vmatpush1.msra.mxu0 %v447
    %855 = vmatprep.subr.mxu0 %v452
    %856 = vmatpush1.msra.mxu0 %v451
    %857 = vmatprep.subr.mxu0 %v456
    %858 = vmatpush1.msra.mxu0 %v455
    %859 = vmatprep.subr.mxu0 %v460
    %860 = vmatpush1.msra.mxu0 %v459
    %861 = vmatprep.subr.mxu0 %v464
    %862 = vmatpush1.msra.mxu0 %v463
    %863 = vmatprep.subr.mxu0 %v468
    %864 = vmatpush1.msra.mxu0 %v467
    %865 = vmatprep.subr.mxu0 %v472
    %866 = vmatpush1.msra.mxu0 %v471
    %867 = vmatprep.subr.mxu0 %v476
    %868 = vmatpush1.msra.mxu0 %v475
    %869 = vmatprep.subr.mxu0 %v480
    %870 = vmatpush1.msra.mxu0 %v479
    %871 = vmatprep.subr.mxu0 0.0
    %872 = vmatpush1.msra.mxu0 0.0
    %873 = vmatprep.subr.mxu0 0.0
    %874 = vmatpush1.msra.mxu0 0.0
    %875 = vmatprep.subr.mxu0 0.0
    %876 = vmatpush1.msra.mxu0 0.0
    %877 = vmatprep.subr.mxu0 0.0
    %878 = vmatpush1.msra.mxu0 0.0
    %879 = vmatprep.subr.mxu0 0.0
    %880 = vmatpush1.msra.mxu0 0.0
    %881 = vmatprep.subr.mxu0 0.0
    %882 = vmatpush1.msra.mxu0 0.0
    %883 = vmatprep.subr.mxu0 0.0
    %884 = vmatpush1.msra.mxu0 0.0
    %885 = vmatprep.subr.mxu0 0.0
    %886 = vmatpush1.msra.mxu0 0.0
    %887 = vmatprep.subr.mxu0 0.0
    %888 = vmatpush1.msra.mxu0 0.0
    %889 = vmatprep.subr.mxu0 0.0
    %890 = vmatpush1.msra.mxu0 0.0
    %891 = vmatprep.subr.mxu0 0.0
    %892 = vmatpush1.msra.mxu0 0.0
    %893 = vmatprep.subr.mxu0 0.0
    %894 = vmatpush1.msra.mxu0 0.0
    %895 = vmatprep.subr.mxu0 0.0
    %896 = vmatpush1.msra.mxu0 0.0
    %897 = vmatprep.subr.mxu0 0.0
    %898 = vmatpush1.msra.mxu0 0.0
    %899 = vmatprep.subr.mxu0 0.0
    %900 = vmatpush1.msra.mxu0 0.0
    %901 = vmatprep.subr.mxu0 0.0
    %902 = vmatpush1.msra.mxu0 0.0
    %903 = vmatprep.mubr.f32.mxu0 0.0
    %904 = vmatmul.mubr.f32.gmra.mrb[0].mxu0 %v834
    %v905 = vpop.f32.mrb[0].mxu0
    %v906 = vadd.f32 %v835, %v905
    %v907 = vpop.f32.mrb[0].mxu0
    %v908 = vadd.f32 %v836, %v907
    %909 = vdwg.mxu0
    %910 = vmatprep.subr.mxu0 %v422
    %911 = vmatpush1.msra.mxu0 %v421
    %912 = vmatprep.subr.mxu0 %v426
    %913 = vmatpush1.msra.mxu0 %v425
    %914 = vmatprep.subr.mxu0 %v430
    %915 = vmatpush1.msra.mxu0 %v429
    %916 = vmatprep.subr.mxu0 %v434
    %917 = vmatpush1.msra.mxu0 %v433
    %918 = vmatprep.subr.mxu0 %v438
    %919 = vmatpush1.msra.mxu0 %v437
    %920 = vmatprep.subr.mxu0 %v442
    %921 = vmatpush1.msra.mxu0 %v441
    %922 = vmatprep.subr.mxu0 %v446
    %923 = vmatpush1.msra.mxu0 %v445
    %924 = vmatprep.subr.mxu0 %v450
    %925 = vmatpush1.msra.mxu0 %v449
    %926 = vmatprep.subr.mxu0 %v454
    %927 = vmatpush1.msra.mxu0 %v453
    %928 = vmatprep.subr.mxu0 %v458
    %929 = vmatpush1.msra.mxu0 %v457
    %930 = vmatprep.subr.mxu0 %v462
    %931 = vmatpush1.msra.mxu0 %v461
    %932 = vmatprep.subr.mxu0 %v466
    %933 = vmatpush1.msra.mxu0 %v465
    %934 = vmatprep.subr.mxu0 %v470
    %935 = vmatpush1.msra.mxu0 %v469
    %936 = vmatprep.subr.mxu0 %v474
    %937 = vmatpush1.msra.mxu0 %v473
    %938 = vmatprep.subr.mxu0 %v478
    %939 = vmatpush1.msra.mxu0 %v477
    %940 = vmatprep.subr.mxu0 %v482
    %941 = vmatpush1.msra.mxu0 %v481
    %942 = vmatprep.subr.mxu0 0.0
    %943 = vmatpush1.msra.mxu0 0.0
    %944 = vmatprep.subr.mxu0 0.0
    %945 = vmatpush1.msra.mxu0 0.0
    %946 = vmatprep.subr.mxu0 0.0
    %947 = vmatpush1.msra.mxu0 0.0
    %948 = vmatprep.subr.mxu0 0.0
    %949 = vmatpush1.msra.mxu0 0.0
    %950 = vmatprep.subr.mxu0 0.0
    %951 = vmatpush1.msra.mxu0 0.0
    %952 = vmatprep.subr.mxu0 0.0
    %953 = vmatpush1.msra.mxu0 0.0
    %954 = vmatprep.subr.mxu0 0.0
    %955 = vmatpush1.msra.mxu0 0.0
    %956 = vmatprep.subr.mxu0 0.0
    %957 = vmatpush1.msra.mxu0 0.0
    %958 = vmatprep.subr.mxu0 0.0
    %959 = vmatpush1.msra.mxu0 0.0
    %960 = vmatprep.subr.mxu0 0.0
    %961 = vmatpush1.msra.mxu0 0.0
    %962 = vmatprep.subr.mxu0 0.0
    %963 = vmatpush1.msra.mxu0 0.0
    %964 = vmatprep.subr.mxu0 0.0
    %965 = vmatpush1.msra.mxu0 0.0
    %966 = vmatprep.subr.mxu0 0.0
    %967 = vmatpush1.msra.mxu0 0.0
    %968 = vmatprep.subr.mxu0 0.0
    %969 = vmatpush1.msra.mxu0 0.0
    %970 = vmatprep.subr.mxu0 0.0
    %971 = vmatpush1.msra.mxu0 0.0
    %972 = vmatprep.subr.mxu0 0.0
    %973 = vmatpush1.msra.mxu0 0.0
    %974 = vmatprep.mubr.f32.mxu0 0.0
    %975 = vmatmul.mubr.f32.gmra.mrb[0].mxu0 %v834
    %v976 = vpop.f32.mrb[0].mxu0
    %v977 = vadd.f32 %v837, %v976
    %v978 = vpop.f32.mrb[0].mxu0
    %v979 = vadd.f32 %v838, %v978
    %980 = vdwg.mxu0
    %v981 = vxor.u32 %v906, 2147483648
    %v982 = vxor.u32 %v908, 2147483648
    %v983 = vxor.u32 %v977, 2147483648
    %v984 = vxor.u32 %v979, 2147483648
    %v985 = vmul.f32 %v981, 1.442695
    %v986 = vpow.pop %v985
    %v987 = vmul.f32 %v982, 1.442695
    %v988 = vpow.pop %v987
    %v989 = vmul.f32 %v983, 1.442695
    %v990 = vpow.pop %v989
    %v991 = vmul.f32 %v984, 1.442695
    %v992 = vpow.pop %v991
    %v993 = vadd.f32 %v986, 1.0
    %v994 = vadd.f32 %v988, 1.0
    %v995 = vadd.f32 %v990, 1.0
    %v996 = vadd.f32 %v992, 1.0
    %v997 = vrcp.pop %v993
    %v998 = vmul.f32 1.0, %v997
    %v999 = vrcp.pop %v994
    %v1000 = vmul.f32 1.0, %v999
    %v1001 = vrcp.pop %v995
    %v1002 = vmul.f32 1.0, %v1001
    %v1003 = vrcp.pop %v996
    %v1004 = vmul.f32 1.0, %v1003
    %v1005 = vmul.f32 %v1002, 2.0
    %v1006 = vsub.f32 %v1005, 1.0
    %v1007 = vmul.f32 %v998, %v832
    %v1008 = vmul.f32 %v1000, %v1006
    %v1009 = vadd.f32 %v1007, %v1008
    %v1010 = vtanh.pop %v1009
    %v1011 = vmul.f32 %v1004, %v1010
    %v1012 = vld [vmem:[#allocation2 + $0x60] sm:$0xff]
    %v1013 = vld [vmem:[#allocation2 + $0x68] sm:$0xff]
    %v1014 = vld [vmem:[#allocation2 + $0x70] sm:$0xff]
    %v1015 = vld [vmem:[#allocation2 + $0x78] sm:$0xff]
    %1016 = vmatprep.subr.mxu0 %v420
    %1017 = vmatpush1.msra.mxu0 %v419
    %1018 = vmatprep.subr.mxu0 %v424
    %1019 = vmatpush1.msra.mxu0 %v423
    %1020 = vmatprep.subr.mxu0 %v428
    %1021 = vmatpush1.msra.mxu0 %v427
    %1022 = vmatprep.subr.mxu0 %v432
    %1023 = vmatpush1.msra.mxu0 %v431
    %1024 = vmatprep.subr.mxu0 %v436
    %1025 = vmatpush1.msra.mxu0 %v435
    %1026 = vmatprep.subr.mxu0 %v440
    %1027 = vmatpush1.msra.mxu0 %v439
    %1028 = vmatprep.subr.mxu0 %v444
    %1029 = vmatpush1.msra.mxu0 %v443
    %1030 = vmatprep.subr.mxu0 %v448
    %1031 = vmatpush1.msra.mxu0 %v447
    %1032 = vmatprep.subr.mxu0 %v452
    %1033 = vmatpush1.msra.mxu0 %v451
    %1034 = vmatprep.subr.mxu0 %v456
    %1035 = vmatpush1.msra.mxu0 %v455
    %1036 = vmatprep.subr.mxu0 %v460
    %1037 = vmatpush1.msra.mxu0 %v459
    %1038 = vmatprep.subr.mxu0 %v464
    %1039 = vmatpush1.msra.mxu0 %v463
    %1040 = vmatprep.subr.mxu0 %v468
    %1041 = vmatpush1.msra.mxu0 %v467
    %1042 = vmatprep.subr.mxu0 %v472
    %1043 = vmatpush1.msra.mxu0 %v471
    %1044 = vmatprep.subr.mxu0 %v476
    %1045 = vmatpush1.msra.mxu0 %v475
    %1046 = vmatprep.subr.mxu0 %v480
    %1047 = vmatpush1.msra.mxu0 %v479
    %1048 = vmatprep.subr.mxu0 0.0
    %1049 = vmatpush1.msra.mxu0 0.0
    %1050 = vmatprep.subr.mxu0 0.0
    %1051 = vmatpush1.msra.mxu0 0.0
    %1052 = vmatprep.subr.mxu0 0.0
    %1053 = vmatpush1.msra.mxu0 0.0
    %1054 = vmatprep.subr.mxu0 0.0
    %1055 = vmatpush1.msra.mxu0 0.0
    %1056 = vmatprep.subr.mxu0 0.0
    %1057 = vmatpush1.msra.mxu0 0.0
    %1058 = vmatprep.subr.mxu0 0.0
    %1059 = vmatpush1.msra.mxu0 0.0
    %1060 = vmatprep.subr.mxu0 0.0
    %1061 = vmatpush1.msra.mxu0 0.0
    %1062 = vmatprep.subr.mxu0 0.0
    %1063 = vmatpush1.msra.mxu0 0.0
    %1064 = vmatprep.subr.mxu0 0.0
    %1065 = vmatpush1.msra.mxu0 0.0
    %1066 = vmatprep.subr.mxu0 0.0
    %1067 = vmatpush1.msra.mxu0 0.0
    %1068 = vmatprep.subr.mxu0 0.0
    %1069 = vmatpush1.msra.mxu0 0.0
    %1070 = vmatprep.subr.mxu0 0.0
    %1071 = vmatpush1.msra.mxu0 0.0
    %1072 = vmatprep.subr.mxu0 0.0
    %1073 = vmatpush1.msra.mxu0 0.0
    %1074 = vmatprep.subr.mxu0 0.0
    %1075 = vmatpush1.msra.mxu0 0.0
    %1076 = vmatprep.subr.mxu0 0.0
    %1077 = vmatpush1.msra.mxu0 0.0
    %1078 = vmatprep.subr.mxu0 0.0
    %1079 = vmatpush1.msra.mxu0 0.0
    %1080 = vmatprep.mubr.f32.mxu0 0.0
    %1081 = vmatmul.mubr.f32.gmra.mrb[0].mxu0 %v1011
    %v1082 = vpop.f32.mrb[0].mxu0
    %v1083 = vadd.f32 %v1012, %v1082
    %v1084 = vpop.f32.mrb[0].mxu0
    %v1085 = vadd.f32 %v1013, %v1084
    %1086 = vdwg.mxu0
    %1087 = vmatprep.subr.mxu0 %v422
    %1088 = vmatpush1.msra.mxu0 %v421
    %1089 = vmatprep.subr.mxu0 %v426
    %1090 = vmatpush1.msra.mxu0 %v425
    %1091 = vmatprep.subr.mxu0 %v430
    %1092 = vmatpush1.msra.mxu0 %v429
    %1093 = vmatprep.subr.mxu0 %v434
    %1094 = vmatpush1.msra.mxu0 %v433
    %1095 = vmatprep.subr.mxu0 %v438
    %1096 = vmatpush1.msra.mxu0 %v437
    %1097 = vmatprep.subr.mxu0 %v442
    %1098 = vmatpush1.msra.mxu0 %v441
    %1099 = vmatprep.subr.mxu0 %v446
    %1100 = vmatpush1.msra.mxu0 %v445
    %1101 = vmatprep.subr.mxu0 %v450
    %1102 = vmatpush1.msra.mxu0 %v449
    %1103 = vmatprep.subr.mxu0 %v454
    %1104 = vmatpush1.msra.mxu0 %v453
    %1105 = vmatprep.subr.mxu0 %v458
    %1106 = vmatpush1.msra.mxu0 %v457
    %1107 = vmatprep.subr.mxu0 %v462
    %1108 = vmatpush1.msra.mxu0 %v461
    %1109 = vmatprep.subr.mxu0 %v466
    %1110 = vmatpush1.msra.mxu0 %v465
    %1111 = vmatprep.subr.mxu0 %v470
    %1112 = vmatpush1.msra.mxu0 %v469
    %1113 = vmatprep.subr.mxu0 %v474
    %1114 = vmatpush1.msra.mxu0 %v473
    %1115 = vmatprep.subr.mxu0 %v478
    %1116 = vmatpush1.msra.mxu0 %v477
    %1117 = vmatprep.subr.mxu0 %v482
    %1118 = vmatpush1.msra.mxu0 %v481
    %1119 = vmatprep.subr.mxu0 0.0
    %1120 = vmatpush1.msra.mxu0 0.0
    %1121 = vmatprep.subr.mxu0 0.0
    %1122 = vmatpush1.msra.mxu0 0.0
    %1123 = vmatprep.subr.mxu0 0.0
    %1124 = vmatpush1.msra.mxu0 0.0
    %1125 = vmatprep.subr.mxu0 0.0
    %1126 = vmatpush1.msra.mxu0 0.0
    %1127 = vmatprep.subr.mxu0 0.0
    %1128 = vmatpush1.msra.mxu0 0.0
    %1129 = vmatprep.subr.mxu0 0.0
    %1130 = vmatpush1.msra.mxu0 0.0
    %1131 = vmatprep.subr.mxu0 0.0
    %1132 = vmatpush1.msra.mxu0 0.0
    %1133 = vmatprep.subr.mxu0 0.0
    %1134 = vmatpush1.msra.mxu0 0.0
    %1135 = vmatprep.subr.mxu0 0.0
    %1136 = vmatpush1.msra.mxu0 0.0
    %1137 = vmatprep.subr.mxu0 0.0
    %1138 = vmatpush1.msra.mxu0 0.0
    %1139 = vmatprep.subr.mxu0 0.0
    %1140 = vmatpush1.msra.mxu0 0.0
    %1141 = vmatprep.subr.mxu0 0.0
    %1142 = vmatpush1.msra.mxu0 0.0
    %1143 = vmatprep.subr.mxu0 0.0
    %1144 = vmatpush1.msra.mxu0 0.0
    %1145 = vmatprep.subr.mxu0 0.0
    %1146 = vmatpush1.msra.mxu0 0.0
    %1147 = vmatprep.subr.mxu0 0.0
    %1148 = vmatpush1.msra.mxu0 0.0
    %1149 = vmatprep.subr.mxu0 0.0
    %1150 = vmatpush1.msra.mxu0 0.0
    %1151 = vmatprep.mubr.f32.mxu0 0.0
    %1152 = vmatmul.mubr.f32.gmra.mrb[0].mxu0 %v1011
    %v1153 = vpop.f32.mrb[0].mxu0
    %v1154 = vadd.f32 %v1014, %v1153
    %v1155 = vpop.f32.mrb[0].mxu0
    %v1156 = vadd.f32 %v1015, %v1155
    %1157 = vdwg.mxu0
    %v1158 = vxor.u32 %v1083, 2147483648
    %v1159 = vxor.u32 %v1085, 2147483648
    %v1160 = vxor.u32 %v1154, 2147483648
    %v1161 = vxor.u32 %v1156, 2147483648
    %v1162 = vmul.f32 %v1158, 1.442695
    %v1163 = vpow.pop %v1162
    %v1164 = vmul.f32 %v1159, 1.442695
    %v1165 = vpow.pop %v1164
    %v1166 = vmul.f32 %v1160, 1.442695
    %v1167 = vpow.pop %v1166
    %v1168 = vmul.f32 %v1161, 1.442695
    %v1169 = vpow.pop %v1168
    %v1170 = vadd.f32 %v1163, 1.0
    %v1171 = vadd.f32 %v1165, 1.0
    %v1172 = vadd.f32 %v1167, 1.0
    %v1173 = vadd.f32 %v1169, 1.0
    %v1174 = vrcp.pop %v1170
    %v1175 = vmul.f32 1.0, %v1174
    %v1176 = vrcp.pop %v1171
    %v1177 = vmul.f32 1.0, %v1176
    %v1178 = vrcp.pop %v1172
    %v1179 = vmul.f32 1.0, %v1178
    %v1180 = vrcp.pop %v1173
    %v1181 = vmul.f32 1.0, %v1180
    %v1182 = vmul.f32 %v1179, 2.0
    %v1183 = vsub.f32 %v1182, 1.0
    %v1184 = vmul.f32 %v1175, %v1009
    %v1185 = vmul.f32 %v1177, %v1183
    %v1186 = vadd.f32 %v1184, %v1185
    %v1187 = vtanh.pop %v1186
    %v1188 = vmul.f32 %v1181, %v1187
    %v1189 = vld [vmem:[#allocation2 + $0x80] sm:$0xff]
    %v1190 = vld [vmem:[#allocation2 + $0x88] sm:$0xff]
    %v1191 = vld [vmem:[#allocation2 + $0x90] sm:$0xff]
    %v1192 = vld [vmem:[#allocation2 + $0x98] sm:$0xff]
    %1193 = vmatprep.subr.mxu0 %v420
    %1194 = vmatpush1.msra.mxu0 %v419
    %1195 = vmatprep.subr.mxu0 %v424
    %1196 = vmatpush1.msra.mxu0 %v423
    %1197 = vmatprep.subr.mxu0 %v428
    %1198 = vmatpush1.msra.mxu0 %v427
    %1199 = vmatprep.subr.mxu0 %v432
    %1200 = vmatpush1.msra.mxu0 %v431
    %1201 = vmatprep.subr.mxu0 %v436
    %1202 = vmatpush1.msra.mxu0 %v435
    %1203 = vmatprep.subr.mxu0 %v440
    %1204 = vmatpush1.msra.mxu0 %v439
    %1205 = vmatprep.subr.mxu0 %v444
    %1206 = vmatpush1.msra.mxu0 %v443
    %1207 = vmatprep.subr.mxu0 %v448
    %1208 = vmatpush1.msra.mxu0 %v447
    %1209 = vmatprep.subr.mxu0 %v452
    %1210 = vmatpush1.msra.mxu0 %v451
    %1211 = vmatprep.subr.mxu0 %v456
    %1212 = vmatpush1.msra.mxu0 %v455
    %1213 = vmatprep.subr.mxu0 %v460
    %1214 = vmatpush1.msra.mxu0 %v459
    %1215 = vmatprep.subr.mxu0 %v464
    %1216 = vmatpush1.msra.mxu0 %v463
    %1217 = vmatprep.subr.mxu0 %v468
    %1218 = vmatpush1.msra.mxu0 %v467
    %1219 = vmatprep.subr.mxu0 %v472
    %1220 = vmatpush1.msra.mxu0 %v471
    %1221 = vmatprep.subr.mxu0 %v476
    %1222 = vmatpush1.msra.mxu0 %v475
    %1223 = vmatprep.subr.mxu0 %v480
    %1224 = vmatpush1.msra.mxu0 %v479
    %1225 = vmatprep.subr.mxu0 0.0
    %1226 = vmatpush1.msra.mxu0 0.0
    %1227 = vmatprep.subr.mxu0 0.0
    %1228 = vmatpush1.msra.mxu0 0.0
    %1229 = vmatprep.subr.mxu0 0.0
    %1230 = vmatpush1.msra.mxu0 0.0
    %1231 = vmatprep.subr.mxu0 0.0
    %1232 = vmatpush1.msra.mxu0 0.0
    %1233 = vmatprep.subr.mxu0 0.0
    %1234 = vmatpush1.msra.mxu0 0.0
    %1235 = vmatprep.subr.mxu0 0.0
    %1236 = vmatpush1.msra.mxu0 0.0
    %1237 = vmatprep.subr.mxu0 0.0
    %1238 = vmatpush1.msra.mxu0 0.0
    %1239 = vmatprep.subr.mxu0 0.0
    %1240 = vmatpush1.msra.mxu0 0.0
    %1241 = vmatprep.subr.mxu0 0.0
    %1242 = vmatpush1.msra.mxu0 0.0
    %1243 = vmatprep.subr.mxu0 0.0
    %1244 = vmatpush1.msra.mxu0 0.0
    %1245 = vmatprep.subr.mxu0 0.0
    %1246 = vmatpush1.msra.mxu0 0.0
    %1247 = vmatprep.subr.mxu0 0.0
    %1248 = vmatpush1.msra.mxu0 0.0
    %1249 = vmatprep.subr.mxu0 0.0
    %1250 = vmatpush1.msra.mxu0 0.0
    %1251 = vmatprep.subr.mxu0 0.0
    %1252 = vmatpush1.msra.mxu0 0.0
    %1253 = vmatprep.subr.mxu0 0.0
    %1254 = vmatpush1.msra.mxu0 0.0
    %1255 = vmatprep.subr.mxu0 0.0
    %1256 = vmatpush1.msra.mxu0 0.0
    %1257 = vmatprep.mubr.f32.mxu0 0.0
    %1258 = vmatmul.mubr.f32.gmra.mrb[0].mxu0 %v1188
    %v1259 = vpop.f32.mrb[0].mxu0
    %v1260 = vadd.f32 %v1189, %v1259
    %v1261 = vpop.f32.mrb[0].mxu0
    %v1262 = vadd.f32 %v1190, %v1261
    %1263 = vdwg.mxu0
    %1264 = vmatprep.subr.mxu0 %v422
    %1265 = vmatpush1.msra.mxu0 %v421
    %1266 = vmatprep.subr.mxu0 %v426
    %1267 = vmatpush1.msra.mxu0 %v425
    %1268 = vmatprep.subr.mxu0 %v430
    %1269 = vmatpush1.msra.mxu0 %v429
    %1270 = vmatprep.subr.mxu0 %v434
    %1271 = vmatpush1.msra.mxu0 %v433
    %1272 = vmatprep.subr.mxu0 %v438
    %1273 = vmatpush1.msra.mxu0 %v437
    %1274 = vmatprep.subr.mxu0 %v442
    %1275 = vmatpush1.msra.mxu0 %v441
    %1276 = vmatprep.subr.mxu0 %v446
    %1277 = vmatpush1.msra.mxu0 %v445
    %1278 = vmatprep.subr.mxu0 %v450
    %1279 = vmatpush1.msra.mxu0 %v449
    %1280 = vmatprep.subr.mxu0 %v454
    %1281 = vmatpush1.msra.mxu0 %v453
    %1282 = vmatprep.subr.mxu0 %v458
    %1283 = vmatpush1.msra.mxu0 %v457
    %1284 = vmatprep.subr.mxu0 %v462
    %1285 = vmatpush1.msra.mxu0 %v461
    %1286 = vmatprep.subr.mxu0 %v466
    %1287 = vmatpush1.msra.mxu0 %v465
    %1288 = vmatprep.subr.mxu0 %v470
    %1289 = vmatpush1.msra.mxu0 %v469
    %1290 = vmatprep.subr.mxu0 %v474
    %1291 = vmatpush1.msra.mxu0 %v473
    %1292 = vmatprep.subr.mxu0 %v478
    %1293 = vmatpush1.msra.mxu0 %v477
    %1294 = vmatprep.subr.mxu0 %v482
    %1295 = vmatpush1.msra.mxu0 %v481
    %1296 = vmatprep.subr.mxu0 0.0
    %1297 = vmatpush1.msra.mxu0 0.0
    %1298 = vmatprep.subr.mxu0 0.0
    %1299 = vmatpush1.msra.mxu0 0.0
    %1300 = vmatprep.subr.mxu0 0.0
    %1301 = vmatpush1.msra.mxu0 0.0
    %1302 = vmatprep.subr.mxu0 0.0
    %1303 = vmatpush1.msra.mxu0 0.0
    %1304 = vmatprep.subr.mxu0 0.0
    %1305 = vmatpush1.msra.mxu0 0.0
    %1306 = vmatprep.subr.mxu0 0.0
    %1307 = vmatpush1.msra.mxu0 0.0
    %1308 = vmatprep.subr.mxu0 0.0
    %1309 = vmatpush1.msra.mxu0 0.0
    %1310 = vmatprep.subr.mxu0 0.0
    %1311 = vmatpush1.msra.mxu0 0.0
    %1312 = vmatprep.subr.mxu0 0.0
    %1313 = vmatpush1.msra.mxu0 0.0
    %1314 = vmatprep.subr.mxu0 0.0
    %1315 = vmatpush1.msra.mxu0 0.0
    %1316 = vmatprep.subr.mxu0 0.0
    %1317 = vmatpush1.msra.mxu0 0.0
    %1318 = vmatprep.subr.mxu0 0.0
    %1319 = vmatpush1.msra.mxu0 0.0
    %1320 = vmatprep.subr.mxu0 0.0
    %1321 = vmatpush1.msra.mxu0 0.0
    %1322 = vmatprep.subr.mxu0 0.0
    %1323 = vmatpush1.msra.mxu0 0.0
    %1324 = vmatprep.subr.mxu0 0.0
    %1325 = vmatpush1.msra.mxu0 0.0
    %1326 = vmatprep.subr.mxu0 0.0
    %1327 = vmatpush1.msra.mxu0 0.0
    %1328 = vmatprep.mubr.f32.mxu0 0.0
    %1329 = vmatmul.mubr.f32.gmra.mrb[0].mxu0 %v1188
    %v1330 = vpop.f32.mrb[0].mxu0
    %v1331 = vadd.f32 %v1191, %v1330
    %v1332 = vpop.f32.mrb[0].mxu0
    %v1333 = vadd.f32 %v1192, %v1332
    %1334 = vdwg.mxu0
    %v1335 = vxor.u32 %v1260, 2147483648
    %v1336 = vxor.u32 %v1262, 2147483648
    %v1337 = vxor.u32 %v1331, 2147483648
    %v1338 = vxor.u32 %v1333, 2147483648
    %v1339 = vmul.f32 %v1335, 1.442695
    %v1340 = vpow.pop %v1339
    %v1341 = vmul.f32 %v1336, 1.442695
    %v1342 = vpow.pop %v1341
    %v1343 = vmul.f32 %v1337, 1.442695
    %v1344 = vpow.pop %v1343
    %v1345 = vmul.f32 %v1338, 1.442695
    %v1346 = vpow.pop %v1345
    %v1347 = vadd.f32 %v1340, 1.0
    %v1348 = vadd.f32 %v1342, 1.0
    %v1349 = vadd.f32 %v1344, 1.0
    %v1350 = vadd.f32 %v1346, 1.0
    %v1351 = vrcp.pop %v1347
    %v1352 = vmul.f32 1.0, %v1351
    %v1353 = vrcp.pop %v1348
    %v1354 = vmul.f32 1.0, %v1353
    %v1355 = vrcp.pop %v1349
    %v1356 = vmul.f32 1.0, %v1355
    %v1357 = vrcp.pop %v1350
    %v1358 = vmul.f32 1.0, %v1357
    %v1359 = vmul.f32 %v1356, 2.0
    %v1360 = vsub.f32 %v1359, 1.0
    %v1361 = vmul.f32 %v1352, %v1186
    %v1362 = vmul.f32 %v1354, %v1360
    %v1363 = vadd.f32 %v1361, %v1362
    %v1364 = vtanh.pop %v1363
    %v1365 = vmul.f32 %v1358, %v1364
    %v1366 = vld [vmem:[#allocation2 + $0xa0] sm:$0xff]
    %v1367 = vld [vmem:[#allocation2 + $0xa8] sm:$0xff]
    %v1368 = vld [vmem:[#allocation2 + $0xb0] sm:$0xff]
    %v1369 = vld [vmem:[#allocation2 + $0xb8] sm:$0xff]
    %1370 = vmatprep.subr.mxu0 %v420
    %1371 = vmatpush1.msra.mxu0 %v419
    %1372 = vmatprep.subr.mxu0 %v424
    %1373 = vmatpush1.msra.mxu0 %v423
    %1374 = vmatprep.subr.mxu0 %v428
    %1375 = vmatpush1.msra.mxu0 %v427
    %1376 = vmatprep.subr.mxu0 %v432
    %1377 = vmatpush1.msra.mxu0 %v431
    %1378 = vmatprep.subr.mxu0 %v436
    %1379 = vmatpush1.msra.mxu0 %v435
    %1380 = vmatprep.subr.mxu0 %v440
    %1381 = vmatpush1.msra.mxu0 %v439
    %1382 = vmatprep.subr.mxu0 %v444
    %1383 = vmatpush1.msra.mxu0 %v443
    %1384 = vmatprep.subr.mxu0 %v448
    %1385 = vmatpush1.msra.mxu0 %v447
    %1386 = vmatprep.subr.mxu0 %v452
    %1387 = vmatpush1.msra.mxu0 %v451
    %1388 = vmatprep.subr.mxu0 %v456
    %1389 = vmatpush1.msra.mxu0 %v455
    %1390 = vmatprep.subr.mxu0 %v460
    %1391 = vmatpush1.msra.mxu0 %v459
    %1392 = vmatprep.subr.mxu0 %v464
    %1393 = vmatpush1.msra.mxu0 %v463
    %1394 = vmatprep.subr.mxu0 %v468
    %1395 = vmatpush1.msra.mxu0 %v467
    %1396 = vmatprep.subr.mxu0 %v472
    %1397 = vmatpush1.msra.mxu0 %v471
    %1398 = vmatprep.subr.mxu0 %v476
    %1399 = vmatpush1.msra.mxu0 %v475
    %1400 = vmatprep.subr.mxu0 %v480
    %1401 = vmatpush1.msra.mxu0 %v479
    %1402 = vmatprep.subr.mxu0 0.0
    %1403 = vmatpush1.msra.mxu0 0.0
    %1404 = vmatprep.subr.mxu0 0.0
    %1405 = vmatpush1.msra.mxu0 0.0
    %1406 = vmatprep.subr.mxu0 0.0
    %1407 = vmatpush1.msra.mxu0 0.0
    %1408 = vmatprep.subr.mxu0 0.0
    %1409 = vmatpush1.msra.mxu0 0.0
    %1410 = vmatprep.subr.mxu0 0.0
    %1411 = vmatpush1.msra.mxu0 0.0
    %1412 = vmatprep.subr.mxu0 0.0
    %1413 = vmatpush1.msra.mxu0 0.0
    %1414 = vmatprep.subr.mxu0 0.0
    %1415 = vmatpush1.msra.mxu0 0.0
    %1416 = vmatprep.subr.mxu0 0.0
    %1417 = vmatpush1.msra.mxu0 0.0
    %1418 = vmatprep.subr.mxu0 0.0
    %1419 = vmatpush1.msra.mxu0 0.0
    %1420 = vmatprep.subr.mxu0 0.0
    %1421 = vmatpush1.msra.mxu0 0.0
    %1422 = vmatprep.subr.mxu0 0.0
    %1423 = vmatpush1.msra.mxu0 0.0
    %1424 = vmatprep.subr.mxu0 0.0
    %1425 = vmatpush1.msra.mxu0 0.0
    %1426 = vmatprep.subr.mxu0 0.0
    %1427 = vmatpush1.msra.mxu0 0.0
    %1428 = vmatprep.subr.mxu0 0.0
    %1429 = vmatpush1.msra.mxu0 0.0
    %1430 = vmatprep.subr.mxu0 0.0
    %1431 = vmatpush1.msra.mxu0 0.0
    %1432 = vmatprep.subr.mxu0 0.0
    %1433 = vmatpush1.msra.mxu0 0.0
    %1434 = vmatprep.mubr.f32.mxu0 0.0
    %1435 = vmatmul.mubr.f32.gmra.mrb[0].mxu0 %v1365
    %v1436 = vpop.f32.mrb[0].mxu0
    %v1437 = vadd.f32 %v1366, %v1436
    %v1438 = vpop.f32.mrb[0].mxu0
    %v1439 = vadd.f32 %v1367, %v1438
    %1440 = vdwg.mxu0
    %1441 = vmatprep.subr.mxu0 %v422
    %1442 = vmatpush1.msra.mxu0 %v421
    %1443 = vmatprep.subr.mxu0 %v426
    %1444 = vmatpush1.msra.mxu0 %v425
    %1445 = vmatprep.subr.mxu0 %v430
    %1446 = vmatpush1.msra.mxu0 %v429
    %1447 = vmatprep.subr.mxu0 %v434
    %1448 = vmatpush1.msra.mxu0 %v433
    %1449 = vmatprep.subr.mxu0 %v438
    %1450 = vmatpush1.msra.mxu0 %v437
    %1451 = vmatprep.subr.mxu0 %v442
    %1452 = vmatpush1.msra.mxu0 %v441
    %1453 = vmatprep.subr.mxu0 %v446
    %1454 = vmatpush1.msra.mxu0 %v445
    %1455 = vmatprep.subr.mxu0 %v450
    %1456 = vmatpush1.msra.mxu0 %v449
    %1457 = vmatprep.subr.mxu0 %v454
    %1458 = vmatpush1.msra.mxu0 %v453
    %1459 = vmatprep.subr.mxu0 %v458
    %1460 = vmatpush1.msra.mxu0 %v457
    %1461 = vmatprep.subr.mxu0 %v462
    %1462 = vmatpush1.msra.mxu0 %v461
    %1463 = vmatprep.subr.mxu0 %v466
    %1464 = vmatpush1.msra.mxu0 %v465
    %1465 = vmatprep.subr.mxu0 %v470
    %1466 = vmatpush1.msra.mxu0 %v469
    %1467 = vmatprep.subr.mxu0 %v474
    %1468 = vmatpush1.msra.mxu0 %v473
    %1469 = vmatprep.subr.mxu0 %v478
    %1470 = vmatpush1.msra.mxu0 %v477
    %1471 = vmatprep.subr.mxu0 %v482
    %1472 = vmatpush1.msra.mxu0 %v481
    %1473 = vmatprep.subr.mxu0 0.0
    %1474 = vmatpush1.msra.mxu0 0.0
    %1475 = vmatprep.subr.mxu0 0.0
    %1476 = vmatpush1.msra.mxu0 0.0
    %1477 = vmatprep.subr.mxu0 0.0
    %1478 = vmatpush1.msra.mxu0 0.0
    %1479 = vmatprep.subr.mxu0 0.0
    %1480 = vmatpush1.msra.mxu0 0.0
    %1481 = vmatprep.subr.mxu0 0.0
    %1482 = vmatpush1.msra.mxu0 0.0
    %1483 = vmatprep.subr.mxu0 0.0
    %1484 = vmatpush1.msra.mxu0 0.0
    %1485 = vmatprep.subr.mxu0 0.0
    %1486 = vmatpush1.msra.mxu0 0.0
    %1487 = vmatprep.subr.mxu0 0.0
    %1488 = vmatpush1.msra.mxu0 0.0
    %1489 = vmatprep.subr.mxu0 0.0
    %1490 = vmatpush1.msra.mxu0 0.0
    %1491 = vmatprep.subr.mxu0 0.0
    %1492 = vmatpush1.msra.mxu0 0.0
    %1493 = vmatprep.subr.mxu0 0.0
    %1494 = vmatpush1.msra.mxu0 0.0
    %1495 = vmatprep.subr.mxu0 0.0
    %1496 = vmatpush1.msra.mxu0 0.0
    %1497 = vmatprep.subr.mxu0 0.0
    %1498 = vmatpush1.msra.mxu0 0.0
    %1499 = vmatprep.subr.mxu0 0.0
    %1500 = vmatpush1.msra.mxu0 0.0
    %1501 = vmatprep.subr.mxu0 0.0
    %1502 = vmatpush1.msra.mxu0 0.0
    %1503 = vmatprep.subr.mxu0 0.0
    %1504 = vmatpush1.msra.mxu0 0.0
    %1505 = vmatprep.mubr.f32.mxu0 0.0
    %1506 = vmatmul.mubr.f32.gmra.mrb[0].mxu0 %v1365
    %v1507 = vpop.f32.mrb[0].mxu0
    %v1508 = vadd.f32 %v1368, %v1507
    %v1509 = vpop.f32.mrb[0].mxu0
    %v1510 = vadd.f32 %v1369, %v1509
    %1511 = vdwg.mxu0
    %v1512 = vxor.u32 %v1437, 2147483648
    %v1513 = vxor.u32 %v1439, 2147483648
    %v1514 = vxor.u32 %v1508, 2147483648
    %v1515 = vxor.u32 %v1510, 2147483648
    %v1516 = vmul.f32 %v1512, 1.442695
    %v1517 = vpow.pop %v1516
    %v1518 = vmul.f32 %v1513, 1.442695
    %v1519 = vpow.pop %v1518
    %v1520 = vmul.f32 %v1514, 1.442695
    %v1521 = vpow.pop %v1520
    %v1522 = vmul.f32 %v1515, 1.442695
    %v1523 = vpow.pop %v1522
    %v1524 = vadd.f32 %v1517, 1.0
    %v1525 = vadd.f32 %v1519, 1.0
    %v1526 = vadd.f32 %v1521, 1.0
    %v1527 = vadd.f32 %v1523, 1.0
    %v1528 = vrcp.pop %v1524
    %v1529 = vmul.f32 1.0, %v1528
    %v1530 = vrcp.pop %v1525
    %v1531 = vmul.f32 1.0, %v1530
    %v1532 = vrcp.pop %v1526
    %v1533 = vmul.f32 1.0, %v1532
    %v1534 = vrcp.pop %v1527
    %v1535 = vmul.f32 1.0, %v1534
    %v1536 = vmul.f32 %v1533, 2.0
    %v1537 = vsub.f32 %v1536, 1.0
    %v1538 = vmul.f32 %v1529, %v1363
    %v1539 = vmul.f32 %v1531, %v1537
    %v1540 = vadd.f32 %v1538, %v1539
    %v1541 = vtanh.pop %v1540
    %v1542 = vmul.f32 %v1535, %v1541
    %v1543 = vld [vmem:[#allocation2 + $0xc0] sm:$0xff]
    %v1544 = vld [vmem:[#allocation2 + $0xc8] sm:$0xff]
    %v1545 = vld [vmem:[#allocation2 + $0xd0] sm:$0xff]
    %v1546 = vld [vmem:[#allocation2 + $0xd8] sm:$0xff]
    %1547 = vmatprep.subr.mxu0 %v420
    %1548 = vmatpush1.msra.mxu0 %v419
    %1549 = vmatprep.subr.mxu0 %v424
    %1550 = vmatpush1.msra.mxu0 %v423
    %1551 = vmatprep.subr.mxu0 %v428
    %1552 = vmatpush1.msra.mxu0 %v427
    %1553 = vmatprep.subr.mxu0 %v432
    %1554 = vmatpush1.msra.mxu0 %v431
    %1555 = vmatprep.subr.mxu0 %v436
    %1556 = vmatpush1.msra.mxu0 %v435
    %1557 = vmatprep.subr.mxu0 %v440
    %1558 = vmatpush1.msra.mxu0 %v439
    %1559 = vmatprep.subr.mxu0 %v444
    %1560 = vmatpush1.msra.mxu0 %v443
    %1561 = vmatprep.subr.mxu0 %v448
    %1562 = vmatpush1.msra.mxu0 %v447
    %1563 = vmatprep.subr.mxu0 %v452
    %1564 = vmatpush1.msra.mxu0 %v451
    %1565 = vmatprep.subr.mxu0 %v456
    %1566 = vmatpush1.msra.mxu0 %v455
    %1567 = vmatprep.subr.mxu0 %v460
    %1568 = vmatpush1.msra.mxu0 %v459
    %1569 = vmatprep.subr.mxu0 %v464
    %1570 = vmatpush1.msra.mxu0 %v463
    %1571 = vmatprep.subr.mxu0 %v468
    %1572 = vmatpush1.msra.mxu0 %v467
    %1573 = vmatprep.subr.mxu0 %v472
    %1574 = vmatpush1.msra.mxu0 %v471
    %1575 = vmatprep.subr.mxu0 %v476
    %1576 = vmatpush1.msra.mxu0 %v475
    %1577 = vmatprep.subr.mxu0 %v480
    %1578 = vmatpush1.msra.mxu0 %v479
    %1579 = vmatprep.subr.mxu0 0.0
    %1580 = vmatpush1.msra.mxu0 0.0
    %1581 = vmatprep.subr.mxu0 0.0
    %1582 = vmatpush1.msra.mxu0 0.0
    %1583 = vmatprep.subr.mxu0 0.0
    %1584 = vmatpush1.msra.mxu0 0.0
    %1585 = vmatprep.subr.mxu0 0.0
    %1586 = vmatpush1.msra.mxu0 0.0
    %1587 = vmatprep.subr.mxu0 0.0
    %1588 = vmatpush1.msra.mxu0 0.0
    %1589 = vmatprep.subr.mxu0 0.0
    %1590 = vmatpush1.msra.mxu0 0.0
    %1591 = vmatprep.subr.mxu0 0.0
    %1592 = vmatpush1.msra.mxu0 0.0
    %1593 = vmatprep.subr.mxu0 0.0
    %1594 = vmatpush1.msra.mxu0 0.0
    %1595 = vmatprep.subr.mxu0 0.0
    %1596 = vmatpush1.msra.mxu0 0.0
    %1597 = vmatprep.subr.mxu0 0.0
    %1598 = vmatpush1.msra.mxu0 0.0
    %1599 = vmatprep.subr.mxu0 0.0
    %1600 = vmatpush1.msra.mxu0 0.0
    %1601 = vmatprep.subr.mxu0 0.0
    %1602 = vmatpush1.msra.mxu0 0.0
    %1603 = vmatprep.subr.mxu0 0.0
    %1604 = vmatpush1.msra.mxu0 0.0
    %1605 = vmatprep.subr.mxu0 0.0
    %1606 = vmatpush1.msra.mxu0 0.0
    %1607 = vmatprep.subr.mxu0 0.0
    %1608 = vmatpush1.msra.mxu0 0.0
    %1609 = vmatprep.subr.mxu0 0.0
    %1610 = vmatpush1.msra.mxu0 0.0
    %1611 = vmatprep.mubr.f32.mxu0 0.0
    %1612 = vmatmul.mubr.f32.gmra.mrb[0].mxu0 %v1542
    %v1613 = vpop.f32.mrb[0].mxu0
    %v1614 = vadd.f32 %v1543, %v1613
    %v1615 = vpop.f32.mrb[0].mxu0
    %v1616 = vadd.f32 %v1544, %v1615
    %1617 = vdwg.mxu0
    %1618 = vmatprep.subr.mxu0 %v422
    %1619 = vmatpush1.msra.mxu0 %v421
    %1620 = vmatprep.subr.mxu0 %v426
    %1621 = vmatpush1.msra.mxu0 %v425
    %1622 = vmatprep.subr.mxu0 %v430
    %1623 = vmatpush1.msra.mxu0 %v429
    %1624 = vmatprep.subr.mxu0 %v434
    %1625 = vmatpush1.msra.mxu0 %v433
    %1626 = vmatprep.subr.mxu0 %v438
    %1627 = vmatpush1.msra.mxu0 %v437
    %1628 = vmatprep.subr.mxu0 %v442
    %1629 = vmatpush1.msra.mxu0 %v441
    %1630 = vmatprep.subr.mxu0 %v446
    %1631 = vmatpush1.msra.mxu0 %v445
    %1632 = vmatprep.subr.mxu0 %v450
    %1633 = vmatpush1.msra.mxu0 %v449
    %1634 = vmatprep.subr.mxu0 %v454
    %1635 = vmatpush1.msra.mxu0 %v453
    %1636 = vmatprep.subr.mxu0 %v458
    %1637 = vmatpush1.msra.mxu0 %v457
    %1638 = vmatprep.subr.mxu0 %v462
    %1639 = vmatpush1.msra.mxu0 %v461
    %1640 = vmatprep.subr.mxu0 %v466
    %1641 = vmatpush1.msra.mxu0 %v465
    %1642 = vmatprep.subr.mxu0 %v470
    %1643 = vmatpush1.msra.mxu0 %v469
    %1644 = vmatprep.subr.mxu0 %v474
    %1645 = vmatpush1.msra.mxu0 %v473
    %1646 = vmatprep.subr.mxu0 %v478
    %1647 = vmatpush1.msra.mxu0 %v477
    %1648 = vmatprep.subr.mxu0 %v482
    %1649 = vmatpush1.msra.mxu0 %v481
    %1650 = vmatprep.subr.mxu0 0.0
    %1651 = vmatpush1.msra.mxu0 0.0
    %1652 = vmatprep.subr.mxu0 0.0
    %1653 = vmatpush1.msra.mxu0 0.0
    %1654 = vmatprep.subr.mxu0 0.0
    %1655 = vmatpush1.msra.mxu0 0.0
    %1656 = vmatprep.subr.mxu0 0.0
    %1657 = vmatpush1.msra.mxu0 0.0
    %1658 = vmatprep.subr.mxu0 0.0
    %1659 = vmatpush1.msra.mxu0 0.0
    %1660 = vmatprep.subr.mxu0 0.0
    %1661 = vmatpush1.msra.mxu0 0.0
    %1662 = vmatprep.subr.mxu0 0.0
    %1663 = vmatpush1.msra.mxu0 0.0
    %1664 = vmatprep.subr.mxu0 0.0
    %1665 = vmatpush1.msra.mxu0 0.0
    %1666 = vmatprep.subr.mxu0 0.0
    %1667 = vmatpush1.msra.mxu0 0.0
    %1668 = vmatprep.subr.mxu0 0.0
    %1669 = vmatpush1.msra.mxu0 0.0
    %1670 = vmatprep.subr.mxu0 0.0
    %1671 = vmatpush1.msra.mxu0 0.0
    %1672 = vmatprep.subr.mxu0 0.0
    %1673 = vmatpush1.msra.mxu0 0.0
    %1674 = vmatprep.subr.mxu0 0.0
    %1675 = vmatpush1.msra.mxu0 0.0
    %1676 = vmatprep.subr.mxu0 0.0
    %1677 = vmatpush1.msra.mxu0 0.0
    %1678 = vmatprep.subr.mxu0 0.0
    %1679 = vmatpush1.msra.mxu0 0.0
    %1680 = vmatprep.subr.mxu0 0.0
    %1681 = vmatpush1.msra.mxu0 0.0
    %1682 = vmatprep.mubr.f32.mxu0 0.0
    %1683 = vmatmul.mubr.f32.gmra.mrb[0].mxu0 %v1542
    %v1684 = vpop.f32.mrb[0].mxu0
    %v1685 = vadd.f32 %v1545, %v1684
    %v1686 = vpop.f32.mrb[0].mxu0
    %v1687 = vadd.f32 %v1546, %v1686
    %1688 = vdwg.mxu0
    %v1689 = vxor.u32 %v1614, 2147483648
    %v1690 = vxor.u32 %v1616, 2147483648
    %v1691 = vxor.u32 %v1685, 2147483648
    %v1692 = vxor.u32 %v1687, 2147483648
    %v1693 = vmul.f32 %v1689, 1.442695
    %v1694 = vpow.pop %v1693
    %v1695 = vmul.f32 %v1690, 1.442695
    %v1696 = vpow.pop %v1695
    %v1697 = vmul.f32 %v1691, 1.442695
    %v1698 = vpow.pop %v1697
    %v1699 = vmul.f32 %v1692, 1.442695
    %v1700 = vpow.pop %v1699
    %v1701 = vadd.f32 %v1694, 1.0
    %v1702 = vadd.f32 %v1696, 1.0
    %v1703 = vadd.f32 %v1698, 1.0
    %v1704 = vadd.f32 %v1700, 1.0
    %v1705 = vrcp.pop %v1701
    %v1706 = vmul.f32 1.0, %v1705
    %v1707 = vrcp.pop %v1702
    %v1708 = vmul.f32 1.0, %v1707
    %v1709 = vrcp.pop %v1703
    %v1710 = vmul.f32 1.0, %v1709
    %v1711 = vrcp.pop %v1704
    %v1712 = vmul.f32 1.0, %v1711
    %v1713 = vmul.f32 %v1710, 2.0
    %v1714 = vsub.f32 %v1713, 1.0
    %v1715 = vmul.f32 %v1706, %v1540
    %v1716 = vmul.f32 %v1708, %v1714
    %v1717 = vadd.f32 %v1715, %v1716
    %v1718 = vtanh.pop %v1717
    %v1719 = vmul.f32 %v1712, %v1718
    %v1720 = vld [vmem:[#allocation2 + $0xe0] sm:$0xff]
    %v1721 = vld [vmem:[#allocation2 + $0xe8] sm:$0xff]
    %v1722 = vld [vmem:[#allocation2 + $0xf0] sm:$0xff]
    %v1723 = vld [vmem:[#allocation2 + $0xf8] sm:$0xff]
    %1724 = vmatprep.subr.mxu0 %v420
    %1725 = vmatpush1.msra.mxu0 %v419
    %1726 = vmatprep.subr.mxu0 %v424
    %1727 = vmatpush1.msra.mxu0 %v423
    %1728 = vmatprep.subr.mxu0 %v428
    %1729 = vmatpush1.msra.mxu0 %v427
    %1730 = vmatprep.subr.mxu0 %v432
    %1731 = vmatpush1.msra.mxu0 %v431
    %1732 = vmatprep.subr.mxu0 %v436
    %1733 = vmatpush1.msra.mxu0 %v435
    %1734 = vmatprep.subr.mxu0 %v440
    %1735 = vmatpush1.msra.mxu0 %v439
    %1736 = vmatprep.subr.mxu0 %v444
    %1737 = vmatpush1.msra.mxu0 %v443
    %1738 = vmatprep.subr.mxu0 %v448
    %1739 = vmatpush1.msra.mxu0 %v447
    %1740 = vmatprep.subr.mxu0 %v452
    %1741 = vmatpush1.msra.mxu0 %v451
    %1742 = vmatprep.subr.mxu0 %v456
    %1743 = vmatpush1.msra.mxu0 %v455
    %1744 = vmatprep.subr.mxu0 %v460
    %1745 = vmatpush1.msra.mxu0 %v459
    %1746 = vmatprep.subr.mxu0 %v464
    %1747 = vmatpush1.msra.mxu0 %v463
    %1748 = vmatprep.subr.mxu0 %v468
    %1749 = vmatpush1.msra.mxu0 %v467
    %1750 = vmatprep.subr.mxu0 %v472
    %1751 = vmatpush1.msra.mxu0 %v471
    %1752 = vmatprep.subr.mxu0 %v476
    %1753 = vmatpush1.msra.mxu0 %v475
    %1754 = vmatprep.subr.mxu0 %v480
    %1755 = vmatpush1.msra.mxu0 %v479
    %1756 = vmatprep.subr.mxu0 0.0
    %1757 = vmatpush1.msra.mxu0 0.0
    %1758 = vmatprep.subr.mxu0 0.0
    %1759 = vmatpush1.msra.mxu0 0.0
    %1760 = vmatprep.subr.mxu0 0.0
    %1761 = vmatpush1.msra.mxu0 0.0
    %1762 = vmatprep.subr.mxu0 0.0
    %1763 = vmatpush1.msra.mxu0 0.0
    %1764 = vmatprep.subr.mxu0 0.0
    %1765 = vmatpush1.msra.mxu0 0.0
    %1766 = vmatprep.subr.mxu0 0.0
    %1767 = vmatpush1.msra.mxu0 0.0
    %1768 = vmatprep.subr.mxu0 0.0
    %1769 = vmatpush1.msra.mxu0 0.0
    %1770 = vmatprep.subr.mxu0 0.0
    %1771 = vmatpush1.msra.mxu0 0.0
    %1772 = vmatprep.subr.mxu0 0.0
    %1773 = vmatpush1.msra.mxu0 0.0
    %1774 = vmatprep.subr.mxu0 0.0
    %1775 = vmatpush1.msra.mxu0 0.0
    %1776 = vmatprep.subr.mxu0 0.0
    %1777 = vmatpush1.msra.mxu0 0.0
    %1778 = vmatprep.subr.mxu0 0.0
    %1779 = vmatpush1.msra.mxu0 0.0
    %1780 = vmatprep.subr.mxu0 0.0
    %1781 = vmatpush1.msra.mxu0 0.0
    %1782 = vmatprep.subr.mxu0 0.0
    %1783 = vmatpush1.msra.mxu0 0.0
    %1784 = vmatprep.subr.mxu0 0.0
    %1785 = vmatpush1.msra.mxu0 0.0
    %1786 = vmatprep.subr.mxu0 0.0
    %1787 = vmatpush1.msra.mxu0 0.0
    %1788 = vmatprep.mubr.f32.mxu0 0.0
    %1789 = vmatmul.mubr.f32.gmra.mrb[0].mxu0 %v1719
    %v1790 = vpop.f32.mrb[0].mxu0
    %v1791 = vadd.f32 %v1720, %v1790
    %v1792 = vpop.f32.mrb[0].mxu0
    %v1793 = vadd.f32 %v1721, %v1792
    %1794 = vdwg.mxu0
    %1795 = vmatprep.subr.mxu0 %v422
    %1796 = vmatpush1.msra.mxu0 %v421
    %1797 = vmatprep.subr.mxu0 %v426
    %1798 = vmatpush1.msra.mxu0 %v425
    %1799 = vmatprep.subr.mxu0 %v430
    %1800 = vmatpush1.msra.mxu0 %v429
    %1801 = vmatprep.subr.mxu0 %v434
    %1802 = vmatpush1.msra.mxu0 %v433
    %1803 = vmatprep.subr.mxu0 %v438
    %1804 = vmatpush1.msra.mxu0 %v437
    %1805 = vmatprep.subr.mxu0 %v442
    %1806 = vmatpush1.msra.mxu0 %v441
    %1807 = vmatprep.subr.mxu0 %v446
    %1808 = vmatpush1.msra.mxu0 %v445
    %1809 = vmatprep.subr.mxu0 %v450
    %1810 = vmatpush1.msra.mxu0 %v449
    %1811 = vmatprep.subr.mxu0 %v454
    %1812 = vmatpush1.msra.mxu0 %v453
    %1813 = vmatprep.subr.mxu0 %v458
    %1814 = vmatpush1.msra.mxu0 %v457
    %1815 = vmatprep.subr.mxu0 %v462
    %1816 = vmatpush1.msra.mxu0 %v461
    %1817 = vmatprep.subr.mxu0 %v466
    %1818 = vmatpush1.msra.mxu0 %v465
    %1819 = vmatprep.subr.mxu0 %v470
    %1820 = vmatpush1.msra.mxu0 %v469
    %1821 = vmatprep.subr.mxu0 %v474
    %1822 = vmatpush1.msra.mxu0 %v473
    %1823 = vmatprep.subr.mxu0 %v478
    %1824 = vmatpush1.msra.mxu0 %v477
    %1825 = vmatprep.subr.mxu0 %v482
    %1826 = vmatpush1.msra.mxu0 %v481
    %1827 = vmatprep.subr.mxu0 0.0
    %1828 = vmatpush1.msra.mxu0 0.0
    %1829 = vmatprep.subr.mxu0 0.0
    %1830 = vmatpush1.msra.mxu0 0.0
    %1831 = vmatprep.subr.mxu0 0.0
    %1832 = vmatpush1.msra.mxu0 0.0
    %1833 = vmatprep.subr.mxu0 0.0
    %1834 = vmatpush1.msra.mxu0 0.0
    %1835 = vmatprep.subr.mxu0 0.0
    %1836 = vmatpush1.msra.mxu0 0.0
    %1837 = vmatprep.subr.mxu0 0.0
    %1838 = vmatpush1.msra.mxu0 0.0
    %1839 = vmatprep.subr.mxu0 0.0
    %1840 = vmatpush1.msra.mxu0 0.0
    %1841 = vmatprep.subr.mxu0 0.0
    %1842 = vmatpush1.msra.mxu0 0.0
    %1843 = vmatprep.subr.mxu0 0.0
    %1844 = vmatpush1.msra.mxu0 0.0
    %1845 = vmatprep.subr.mxu0 0.0
    %1846 = vmatpush1.msra.mxu0 0.0
    %1847 = vmatprep.subr.mxu0 0.0
    %1848 = vmatpush1.msra.mxu0 0.0
    %1849 = vmatprep.subr.mxu0 0.0
    %1850 = vmatpush1.msra.mxu0 0.0
    %1851 = vmatprep.subr.mxu0 0.0
    %1852 = vmatpush1.msra.mxu0 0.0
    %1853 = vmatprep.subr.mxu0 0.0
    %1854 = vmatpush1.msra.mxu0 0.0
    %1855 = vmatprep.subr.mxu0 0.0
    %1856 = vmatpush1.msra.mxu0 0.0
    %1857 = vmatprep.subr.mxu0 0.0
    %1858 = vmatpush1.msra.mxu0 0.0
    %1859 = vmatprep.mubr.f32.mxu0 0.0
    %1860 = vmatmul.mubr.f32.gmra.mrb[0].mxu0 %v1719
    %v1861 = vpop.f32.mrb[0].mxu0
    %v1862 = vadd.f32 %v1722, %v1861
    %v1863 = vpop.f32.mrb[0].mxu0
    %v1864 = vadd.f32 %v1723, %v1863
    %1865 = vdwg.mxu0
    %v1866 = vxor.u32 %v1791, 2147483648
    %v1867 = vxor.u32 %v1793, 2147483648
    %v1868 = vxor.u32 %v1862, 2147483648
    %v1869 = vxor.u32 %v1864, 2147483648
    %v1870 = vmul.f32 %v1866, 1.442695
    %v1871 = vpow.pop %v1870
    %v1872 = vmul.f32 %v1867, 1.442695
    %v1873 = vpow.pop %v1872
    %v1874 = vmul.f32 %v1868, 1.442695
    %v1875 = vpow.pop %v1874
    %v1876 = vmul.f32 %v1869, 1.442695
    %v1877 = vpow.pop %v1876
    %v1878 = vadd.f32 %v1871, 1.0
    %v1879 = vadd.f32 %v1873, 1.0
    %v1880 = vadd.f32 %v1875, 1.0
    %v1881 = vadd.f32 %v1877, 1.0
    %v1882 = vrcp.pop %v1878
    %v1883 = vmul.f32 1.0, %v1882
    %v1884 = vrcp.pop %v1879
    %v1885 = vmul.f32 1.0, %v1884
    %v1886 = vrcp.pop %v1880
    %v1887 = vmul.f32 1.0, %v1886
    %v1888 = vrcp.pop %v1881
    %v1889 = vmul.f32 1.0, %v1888
    %v1890 = vmul.f32 %v1887, 2.0
    %v1891 = vsub.f32 %v1890, 1.0
    %v1892 = vmul.f32 %v1883, %v1717
    %v1893 = vmul.f32 %v1885, %v1891
    %v1894 = vadd.f32 %v1892, %v1893
    %v1895 = vtanh.pop %v1894
    %v1896 = vmul.f32 %v1889, %v1895
    %v1897 = vld [vmem:[#allocation2 + $0x100] sm:$0xff]
    %v1898 = vld [vmem:[#allocation2 + $0x108] sm:$0xff]
    %v1899 = vld [vmem:[#allocation2 + $0x110] sm:$0xff]
    %v1900 = vld [vmem:[#allocation2 + $0x118] sm:$0xff]
    %1901 = vmatprep.subr.mxu0 %v420
    %1902 = vmatpush1.msra.mxu0 %v419
    %1903 = vmatprep.subr.mxu0 %v424
    %1904 = vmatpush1.msra.mxu0 %v423
    %1905 = vmatprep.subr.mxu0 %v428
    %1906 = vmatpush1.msra.mxu0 %v427
    %1907 = vmatprep.subr.mxu0 %v432
    %1908 = vmatpush1.msra.mxu0 %v431
    %1909 = vmatprep.subr.mxu0 %v436
    %1910 = vmatpush1.msra.mxu0 %v435
    %1911 = vmatprep.subr.mxu0 %v440
    %1912 = vmatpush1.msra.mxu0 %v439
    %1913 = vmatprep.subr.mxu0 %v444
    %1914 = vmatpush1.msra.mxu0 %v443
    %1915 = vmatprep.subr.mxu0 %v448
    %1916 = vmatpush1.msra.mxu0 %v447
    %1917 = vmatprep.subr.mxu0 %v452
    %1918 = vmatpush1.msra.mxu0 %v451
    %1919 = vmatprep.subr.mxu0 %v456
    %1920 = vmatpush1.msra.mxu0 %v455
    %1921 = vmatprep.subr.mxu0 %v460
    %1922 = vmatpush1.msra.mxu0 %v459
    %1923 = vmatprep.subr.mxu0 %v464
    %1924 = vmatpush1.msra.mxu0 %v463
    %1925 = vmatprep.subr.mxu0 %v468
    %1926 = vmatpush1.msra.mxu0 %v467
    %1927 = vmatprep.subr.mxu0 %v472
    %1928 = vmatpush1.msra.mxu0 %v471
    %1929 = vmatprep.subr.mxu0 %v476
    %1930 = vmatpush1.msra.mxu0 %v475
    %1931 = vmatprep.subr.mxu0 %v480
    %1932 = vmatpush1.msra.mxu0 %v479
    %1933 = vmatprep.subr.mxu0 0.0
    %1934 = vmatpush1.msra.mxu0 0.0
    %1935 = vmatprep.subr.mxu0 0.0
    %1936 = vmatpush1.msra.mxu0 0.0
    %1937 = vmatprep.subr.mxu0 0.0
    %1938 = vmatpush1.msra.mxu0 0.0
    %1939 = vmatprep.subr.mxu0 0.0
    %1940 = vmatpush1.msra.mxu0 0.0
    %1941 = vmatprep.subr.mxu0 0.0
    %1942 = vmatpush1.msra.mxu0 0.0
    %1943 = vmatprep.subr.mxu0 0.0
    %1944 = vmatpush1.msra.mxu0 0.0
    %1945 = vmatprep.subr.mxu0 0.0
    %1946 = vmatpush1.msra.mxu0 0.0
    %1947 = vmatprep.subr.mxu0 0.0
    %1948 = vmatpush1.msra.mxu0 0.0
    %1949 = vmatprep.subr.mxu0 0.0
    %1950 = vmatpush1.msra.mxu0 0.0
    %1951 = vmatprep.subr.mxu0 0.0
    %1952 = vmatpush1.msra.mxu0 0.0
    %1953 = vmatprep.subr.mxu0 0.0
    %1954 = vmatpush1.msra.mxu0 0.0
    %1955 = vmatprep.subr.mxu0 0.0
    %1956 = vmatpush1.msra.mxu0 0.0
    %1957 = vmatprep.subr.mxu0 0.0
    %1958 = vmatpush1.msra.mxu0 0.0
    %1959 = vmatprep.subr.mxu0 0.0
    %1960 = vmatpush1.msra.mxu0 0.0
    %1961 = vmatprep.subr.mxu0 0.0
    %1962 = vmatpush1.msra.mxu0 0.0
    %1963 = vmatprep.subr.mxu0 0.0
    %1964 = vmatpush1.msra.mxu0 0.0
    %1965 = vmatprep.mubr.f32.mxu0 0.0
    %1966 = vmatmul.mubr.f32.gmra.mrb[0].mxu0 %v1896
    %v1967 = vpop.f32.mrb[0].mxu0
    %v1968 = vadd.f32 %v1897, %v1967
    %v1969 = vpop.f32.mrb[0].mxu0
    %v1970 = vadd.f32 %v1898, %v1969
    %1971 = vdwg.mxu0
    %1972 = vmatprep.subr.mxu0 %v422
    %1973 = vmatpush1.msra.mxu0 %v421
    %1974 = vmatprep.subr.mxu0 %v426
    %1975 = vmatpush1.msra.mxu0 %v425
    %1976 = vmatprep.subr.mxu0 %v430
    %1977 = vmatpush1.msra.mxu0 %v429
    %1978 = vmatprep.subr.mxu0 %v434
    %1979 = vmatpush1.msra.mxu0 %v433
    %1980 = vmatprep.subr.mxu0 %v438
    %1981 = vmatpush1.msra.mxu0 %v437
    %1982 = vmatprep.subr.mxu0 %v442
    %1983 = vmatpush1.msra.mxu0 %v441
    %1984 = vmatprep.subr.mxu0 %v446
    %1985 = vmatpush1.msra.mxu0 %v445
    %1986 = vmatprep.subr.mxu0 %v450
    %1987 = vmatpush1.msra.mxu0 %v449
    %1988 = vmatprep.subr.mxu0 %v454
    %1989 = vmatpush1.msra.mxu0 %v453
    %1990 = vmatprep.subr.mxu0 %v458
    %1991 = vmatpush1.msra.mxu0 %v457
    %1992 = vmatprep.subr.mxu0 %v462
    %1993 = vmatpush1.msra.mxu0 %v461
    %1994 = vmatprep.subr.mxu0 %v466
    %1995 = vmatpush1.msra.mxu0 %v465
    %1996 = vmatprep.subr.mxu0 %v470
    %1997 = vmatpush1.msra.mxu0 %v469
    %1998 = vmatprep.subr.mxu0 %v474
    %1999 = vmatpush1.msra.mxu0 %v473
    %2000 = vmatprep.subr.mxu0 %v478
    %2001 = vmatpush1.msra.mxu0 %v477
    %2002 = vmatprep.subr.mxu0 %v482
    %2003 = vmatpush1.msra.mxu0 %v481
    %2004 = vmatprep.subr.mxu0 0.0
    %2005 = vmatpush1.msra.mxu0 0.0
    %2006 = vmatprep.subr.mxu0 0.0
    %2007 = vmatpush1.msra.mxu0 0.0
    %2008 = vmatprep.subr.mxu0 0.0
    %2009 = vmatpush1.msra.mxu0 0.0
    %2010 = vmatprep.subr.mxu0 0.0
    %2011 = vmatpush1.msra.mxu0 0.0
    %2012 = vmatprep.subr.mxu0 0.0
    %2013 = vmatpush1.msra.mxu0 0.0
    %2014 = vmatprep.subr.mxu0 0.0
    %2015 = vmatpush1.msra.mxu0 0.0
    %2016 = vmatprep.subr.mxu0 0.0
    %2017 = vmatpush1.msra.mxu0 0.0
    %2018 = vmatprep.subr.mxu0 0.0
    %2019 = vmatpush1.msra.mxu0 0.0
    %2020 = vmatprep.subr.mxu0 0.0
    %2021 = vmatpush1.msra.mxu0 0.0
    %2022 = vmatprep.subr.mxu0 0.0
    %2023 = vmatpush1.msra.mxu0 0.0
    %2024 = vmatprep.subr.mxu0 0.0
    %2025 = vmatpush1.msra.mxu0 0.0
    %2026 = vmatprep.subr.mxu0 0.0
    %2027 = vmatpush1.msra.mxu0 0.0
    %2028 = vmatprep.subr.mxu0 0.0
    %2029 = vmatpush1.msra.mxu0 0.0
    %2030 = vmatprep.subr.mxu0 0.0
    %2031 = vmatpush1.msra.mxu0 0.0
    %2032 = vmatprep.subr.mxu0 0.0
    %2033 = vmatpush1.msra.mxu0 0.0
    %2034 = vmatprep.subr.mxu0 0.0
    %2035 = vmatpush1.msra.mxu0 0.0
    %2036 = vmatprep.mubr.f32.mxu0 0.0
    %2037 = vmatmul.mubr.f32.gmra.mrb[0].mxu0 %v1896
    %v2038 = vpop.f32.mrb[0].mxu0
    %v2039 = vadd.f32 %v1899, %v2038
    %v2040 = vpop.f32.mrb[0].mxu0
    %v2041 = vadd.f32 %v1900, %v2040
    %2042 = vdwg.mxu0
    %v2043 = vxor.u32 %v1968, 2147483648
    %v2044 = vxor.u32 %v1970, 2147483648
    %v2045 = vxor.u32 %v2039, 2147483648
    %v2046 = vxor.u32 %v2041, 2147483648
    %v2047 = vmul.f32 %v2043, 1.442695
    %v2048 = vpow.pop %v2047
    %v2049 = vmul.f32 %v2044, 1.442695
    %v2050 = vpow.pop %v2049
    %v2051 = vmul.f32 %v2045, 1.442695
    %v2052 = vpow.pop %v2051
    %v2053 = vmul.f32 %v2046, 1.442695
    %v2054 = vpow.pop %v2053
    %v2055 = vadd.f32 %v2048, 1.0
    %v2056 = vadd.f32 %v2050, 1.0
    %v2057 = vadd.f32 %v2052, 1.0
    %v2058 = vadd.f32 %v2054, 1.0
    %v2059 = vrcp.pop %v2055
    %v2060 = vmul.f32 1.0, %v2059
    %v2061 = vrcp.pop %v2056
    %v2062 = vmul.f32 1.0, %v2061
    %v2063 = vrcp.pop %v2057
    %v2064 = vmul.f32 1.0, %v2063
    %v2065 = vrcp.pop %v2058
    %v2066 = vmul.f32 1.0, %v2065
    %v2067 = vmul.f32 %v2064, 2.0
    %v2068 = vsub.f32 %v2067, 1.0
    %v2069 = vmul.f32 %v2060, %v1894
    %v2070 = vmul.f32 %v2062, %v2068
    %v2071 = vadd.f32 %v2069, %v2070
    %v2072 = vtanh.pop %v2071
    %v2073 = vmul.f32 %v2066, %v2072
    %v2074 = vsel %vm414, %v1896, %v2073
    %v2075 = vsel %vm414, %v1894, %v2071
    %v2076 = vld [vmem:[%s6] sm:$0xff]
    %v2077 = vld [vmem:[%s6 + $0x8] sm:$0xff]
    %v2078 = vld [vmem:[%s6 + $0x10] sm:$0xff]
    %v2079 = vld [vmem:[%s6 + $0x18] sm:$0xff]
    %v2080 = vld [vmem:[%s6 + $0x20] sm:$0xff]
    %v2081 = vld [vmem:[%s6 + $0x28] sm:$0xff]
    %v2082 = vld [vmem:[%s6 + $0x30] sm:$0xff]
    %v2083 = vld [vmem:[%s6 + $0x38] sm:$0xff]
    %v2084 = vld [vmem:[%s6 + $0x40] sm:$0xff]
    %v2085 = vld [vmem:[%s6 + $0x48] sm:$0xff]
    %v2086 = vld [vmem:[%s6 + $0x50] sm:$0xff]
    %v2087 = vld [vmem:[%s6 + $0x58] sm:$0xff]
    %v2088 = vld [vmem:[%s6 + $0x60] sm:$0xff]
    %v2089 = vld [vmem:[%s6 + $0x68] sm:$0xff]
    %v2090 = vld [vmem:[%s6 + $0x70] sm:$0xff]
    %v2091 = vld [vmem:[%s6 + $0x78] sm:$0xff]
    %v2092 = vld [vmem:[%s7] sm:$0x1]
    %v2094 = vlaneseq
    %v2095 = vshrl.u32 %v2094, 7
    %v2096 = vsub.s32 0, %v2095
    %v2097 = vrot.slane %v2092, %v2096
    %2099 = vmatprep.subr.mxu0 0.0
    %2100 = vmatpush1.msra.mxu0 %v2076
    %2101 = vmatprep.subr.mxu0 0.0
    %2102 = vmatpush1.msra.mxu0 %v2077
    %2103 = vmatprep.subr.mxu0 0.0
    %2104 = vmatpush1.msra.mxu0 %v2078
    %2105 = vmatprep.subr.mxu0 0.0
    %2106 = vmatpush1.msra.mxu0 %v2079
    %2107 = vmatprep.subr.mxu0 0.0
    %2108 = vmatpush1.msra.mxu0 %v2080
    %2109 = vmatprep.subr.mxu0 0.0
    %2110 = vmatpush1.msra.mxu0 %v2081
    %2111 = vmatprep.subr.mxu0 0.0
    %2112 = vmatpush1.msra.mxu0 %v2082
    %2113 = vmatprep.subr.mxu0 0.0
    %2114 = vmatpush1.msra.mxu0 %v2083
    %2115 = vmatprep.subr.mxu0 0.0
    %2116 = vmatpush1.msra.mxu0 %v2084
    %2117 = vmatprep.subr.mxu0 0.0
    %2118 = vmatpush1.msra.mxu0 %v2085
    %2119 = vmatprep.subr.mxu0 0.0
    %2120 = vmatpush1.msra.mxu0 %v2086
    %2121 = vmatprep.subr.mxu0 0.0
    %2122 = vmatpush1.msra.mxu0 %v2087
    %2123 = vmatprep.subr.mxu0 0.0
    %2124 = vmatpush1.msra.mxu0 %v2088
    %2125 = vmatprep.subr.mxu0 0.0
    %2126 = vmatpush1.msra.mxu0 %v2089
    %2127 = vmatprep.subr.mxu0 0.0
    %2128 = vmatpush1.msra.mxu0 %v2090
    %2129 = vmatprep.subr.mxu0 0.0
    %2130 = vmatpush1.msra.mxu0 %v2091
    %2131 = vmatprep.subr.mxu0 0.0
    %2132 = vmatpush1.msra.mxu0 0.0
    %2133 = vmatprep.subr.mxu0 0.0
    %2134 = vmatpush1.msra.mxu0 0.0
    %2135 = vmatprep.subr.mxu0 0.0
    %2136 = vmatpush1.msra.mxu0 0.0
    %2137 = vmatprep.subr.mxu0 0.0
    %2138 = vmatpush1.msra.mxu0 0.0
    %2139 = vmatprep.subr.mxu0 0.0
    %2140 = vmatpush1.msra.mxu0 0.0
    %2141 = vmatprep.subr.mxu0 0.0
    %2142 = vmatpush1.msra.mxu0 0.0
    %2143 = vmatprep.subr.mxu0 0.0
    %2144 = vmatpush1.msra.mxu0 0.0
    %2145 = vmatprep.subr.mxu0 0.0
    %2146 = vmatpush1.msra.mxu0 0.0
    %2147 = vmatprep.subr.mxu0 0.0
    %2148 = vmatpush1.msra.mxu0 0.0
    %2149 = vmatprep.subr.mxu0 0.0
    %2150 = vmatpush1.msra.mxu0 0.0
    %2151 = vmatprep.subr.mxu0 0.0
    %2152 = vmatpush1.msra.mxu0 0.0
    %2153 = vmatprep.subr.mxu0 0.0
    %2154 = vmatpush1.msra.mxu0 0.0
    %2155 = vmatprep.subr.mxu0 0.0
    %2156 = vmatpush1.msra.mxu0 0.0
    %2157 = vmatprep.subr.mxu0 0.0
    %2158 = vmatpush1.msra.mxu0 0.0
    %2159 = vmatprep.subr.mxu0 0.0
    %2160 = vmatpush1.msra.mxu0 0.0
    %2161 = vmatprep.subr.mxu0 0.0
    %2162 = vmatpush1.msra.mxu0 0.0
    %2163 = vmatprep.mubr.f32.mxu0 0.0
    %2164 = vmatmul.mubr.f32.gmra.mrb[0].mxu0 %v2074
    %v2165 = vpop.f32.mrb[0].mxu0
    %v2166 = vadd.f32 %v2097, %v2165
    %v2167 = vpop.f32.mrb[0].mxu0
    %2168 = vdwg.mxu0
    %vm2169 = vcmask 189440
    %2170 = vst.msk [vmem:[#allocation6] sm:$0x3] %vm2169, %v2166
    %vm2171 = vcmask 517120
    %2172 = vst.msk [vmem:[%s9] sm:$0x3] %vm2171, %v2074
    %2173 = vst.msk [vmem:[%s10] sm:$0x3] %vm2171, %v2075
    // Predicated region
    $region38: #{vanilla_lstm_forward.1} parent=1 // pred_check
      _
    $region39: #{vanilla_lstm_forward.1} parent=1 // pred_check_branch
      %2175 = sbr.rel (0) target = $region41
    $region40: #{vanilla_lstm_forward.1} parent=1 // pred_region
      %s2177 = ssub.s32 32, 32
      %2178 = vsyncadd [#allocation5], %s2177
      %s2180 = sshll.u32 [#allocation6], 4
      %s2181 = int_to_ptr.vmem [resolvable:$true] %s2180
      %2183 = dma.vmem_to_hbm [thread:$0]  %s2181, 32, %s8, [#allocation5]
    $region41: #{vanilla_lstm_forward.1} parent=1 // pred_fallthru
      _
    // Predicated region
    $region42: #{vanilla_lstm_forward.1} parent=1 // pred_check
      _
    $region43: #{vanilla_lstm_forward.1} parent=1 // pred_check_branch
      %2185 = sbr.rel (0) target = $region45
    $region44: #{vanilla_lstm_forward.1} parent=1 // pred_region
      _
    $region45: #{vanilla_lstm_forward.1} parent=1 // pred_fallthru
      _
    // Predicated region
    $region46: #{vanilla_lstm_forward.1} parent=1 // pred_check
      _
    $region47: #{vanilla_lstm_forward.1} parent=1 // pred_check_branch
      %2187 = sbr.rel (0) target = $region49
    $region48: #{vanilla_lstm_forward.1} parent=1 // pred_region
      _
    $region49: #{vanilla_lstm_forward.1} parent=1 // pred_fallthru
      _
    // Predicated region
    $region50: #{vanilla_lstm_forward.1} parent=1 // pred_check
      _
    $region51: #{vanilla_lstm_forward.1} parent=1 // pred_check_branch
      %2189 = sbr.rel (0) target = $region53
    $region52: #{vanilla_lstm_forward.1} parent=1 // pred_region
      %2190 = dma.done [#allocation5], 32
    $region53: #{vanilla_lstm_forward.1} parent=1 // pred_fallthru
      _
    // Predicated region
    $region54: #{vanilla_lstm_forward.1} parent=1 // pred_check
      _
    $region55: #{vanilla_lstm_forward.1} parent=1 // pred_check_branch
      %2192 = sbr.rel (0) target = $region57
    $region56: #{vanilla_lstm_forward.1} parent=1 // pred_region
      _
    $region57: #{vanilla_lstm_forward.1} parent=1 // pred_fallthru
      _
    // Predicated region
    $region58: #{vanilla_lstm_forward.1} parent=1 // pred_check
      _
    $region59: #{vanilla_lstm_forward.1} parent=1 // pred_check_branch
      %2194 = sbr.rel (0) target = $region61
    $region60: #{vanilla_lstm_forward.1} parent=1 // pred_region
      _
    $region61: #{vanilla_lstm_forward.1} parent=1 // pred_fallthru
      _
    %2195 = vsyncpa [#allocation4], 1
    %2196 = vsyncpa [#allocation5], 1

</llo_original>
